<compile_context>
chip_gen: v5e
topology: v5e:2x2
jax: 0.10.0
libtpu: 0.0.40
codegen_flags: <defaults>
</compile_context>

<pallas_src>
import functools

import jax
import jax.numpy as jnp
from jax.experimental import pallas as pl
from jax.experimental.pallas import tpu as pltpu


def _round_up(x, m):
    return ((x + m - 1) // m) * m


def _training_box_kernel(tgt_ref, x_ref, w1t_ref, b1_ref, w2p_ref, b2_ref, p_ref,
                         loss_ref, acc_ref, *, tb, inv_hw, nc_true, n_true, n_inner):
    """One batch tile (TB samples): fused student forward + CE partial sum."""
    inner = pl.program_id(1)

    @pl.when(inner == 0)
    def _init():
        acc_ref[...] = jnp.zeros_like(acc_ref)

    nc_pad = w2p_ref.shape[1]

    # ---- student: 1x1 conv over the whole tile as ONE MXU matmul ----------
    # x block is (Cin, TB*HW): lane axis = TB*HW (dense).
    h = jnp.dot(w1t_ref[...], x_ref[...],
                preferred_element_type=jnp.float32)               # (CH_PAD, TB*HW) f32
    h = jnp.maximum(h + b1_ref[...], 0.0)                         # bias + ReLU (f32)

    # ---- global average pool: ONE MXU matmul against the block-sum matrix --
    # P[s, b] = 1 if s // HW == b, so h @ P sums each sample's HW columns.
    pooled_t = jnp.dot(h.astype(jnp.bfloat16), p_ref[...],
                       preferred_element_type=jnp.float32) * inv_hw   # (CH_PAD, TB) f32

    # ---- classifier head, classes on lanes: logits (TB, NC_PAD) -----------
    logits = jax.lax.dot_general(
        pooled_t.astype(jnp.bfloat16), w2p_ref[...],
        dimension_numbers=(((0,), (0,)), ((), ())),               # contract CH_PAD
        preferred_element_type=jnp.float32) + b2_ref[...]         # (TB, NC_PAD) f32

    # ---- criterion: mean cross-entropy, lane-dense log-sum-exp ------------
    cls = jax.lax.broadcasted_iota(jnp.int32, (tb, nc_pad), 1)    # class id per lane
    row = jax.lax.broadcasted_iota(jnp.int32, (tb, 1), 0)         # sample row in tile
    masked = jnp.where(cls < nc_true, logits, jnp.float32(-1e30))  # drop padded classes
    m = jnp.max(masked, axis=-1, keepdims=True)                   # (TB, 1)
    lse = m + jnp.log(jnp.sum(jnp.exp(masked - m), axis=-1, keepdims=True))

    base = (pl.program_id(0) * n_inner + inner) * tb
    valid = (base + row) < n_true                                  # mask padded batch rows
    hit = cls == tgt_ref[...]                                      # (TB, NC_PAD) one-hot
    acc_ref[...] += jnp.where(jnp.logical_and(hit, valid), lse - masked, 0.0)

    @pl.when(inner == pl.num_programs(1) - 1)
    def _finalize():
        s = jnp.sum(acc_ref[...], axis=1, keepdims=True)           # (TB, 1)
        total = jnp.sum(s, axis=0, keepdims=True)                  # (1, 1) raw NLL sum
        loss_ref[...] = jnp.zeros_like(loss_ref) + total.reshape(1, 1, 1)


def training_box_forward(x_nchw, targets, w1, b1, w2, b2, *, tile_batch=64, core_splits=2):
    """x_nchw: [N, Cin, H, W] f32; targets: [N] int.  Returns scalar total_loss.

    tile_batch (TB) = samples per grid step.  VMEM budget per step:
      2 buffers * max(Cin,16) * TB*HW * 2B (bf16 x tile, sublane-padded)
      + P (TB*HW, TB) bf16 + resident padded weights + (CH_PAD, TB*HW) f32 temp.
    Size TB so this fits scoped VMEM (v5e 16 MiB default / 128 MiB physical,
    v6e 32/128 MiB, v7x 32/64 MiB); vmem_limit_bytes below raises the cap.
    core_splits=2 lets v7x shard the outer grid axis across both TensorCores.
    """
    N, Cin, H, W = x_nchw.shape
    HW = H * W
    Ch = w1.shape[1]
    NC = w2.shape[1]
    CH_PAD = _round_up(Ch, 16)       # sublane (bf16) granularity only, NOT 128
    NC_PAD = _round_up(NC, 128)      # classes live on the lane axis
    TB = int(tile_batch)
    assert TB % 8 == 0, "tile_batch must be a multiple of 8"
    assert (TB * HW) % 128 == 0, "TB*HW must be a multiple of 128 lanes"
    N_pad = _round_up(max(N, TB), TB)
    n_tiles = N_pad // TB
    n_outer = core_splits if (core_splits > 1 and n_tiles % core_splits == 0) else 1
    n_inner = n_tiles // n_outer

    # Layout: (N, Cin, HW) -> (Cin, N*HW); lane axis stays HW-dense inside each sample.
    x = jnp.transpose(x_nchw.reshape(N, Cin, HW), (1, 0, 2)).reshape(Cin, N * HW)
    x = x.astype(jnp.bfloat16)
    if N_pad != N:
        x = jnp.pad(x, ((0, 0), (0, (N_pad - N) * HW)))
    tgt = targets.astype(jnp.int32).reshape(N, 1)
    if N_pad != N:
        tgt = jnp.pad(tgt, ((0, N_pad - N), (0, 0)))

    # Padded weights (small, resident).
    w1t = jnp.pad(w1.T.astype(jnp.bfloat16), ((0, CH_PAD - Ch), (0, 0)))            # (CH_PAD, Cin)
    b1c = jnp.pad(b1.reshape(Ch, 1).astype(jnp.float32), ((0, CH_PAD - Ch), (0, 0)))  # (CH_PAD, 1)
    w2p = jnp.pad(w2.astype(jnp.bfloat16), ((0, CH_PAD - Ch), (0, NC_PAD - NC)))    # (CH_PAD, NC_PAD)
    b2c = jnp.pad(b2.reshape(1, NC).astype(jnp.float32), ((0, 0), (0, NC_PAD - NC)))  # (1, NC_PAD)

    # Constant block-sum pooling matrix (values 1.0, exact in bf16).
    pmat = (jnp.arange(TB * HW, dtype=jnp.int32)[:, None] // HW
            == jnp.arange(TB, dtype=jnp.int32)[None, :]).astype(jnp.bfloat16)       # (TB*HW, TB)

    kernel = functools.partial(_training_box_kernel, tb=TB, inv_hw=1.0 / HW,
                               nc_true=NC, n_true=N, n_inner=n_inner)

    partial = pl.pallas_call(
        kernel,
        out_shape=jax.ShapeDtypeStruct((n_outer, 8, 128), jnp.float32),
        grid_spec=pltpu.PrefetchScalarGridSpec(
            num_scalar_prefetch=0,
            grid=(n_outer, n_inner),
            in_specs=[
                pl.BlockSpec((TB, 1), lambda o, i: (o * n_inner + i, 0)),        # targets
                pl.BlockSpec((Cin, TB * HW), lambda o, i: (0, o * n_inner + i)),  # x tile
                pl.BlockSpec((CH_PAD, Cin), lambda o, i: (0, 0)),                # conv weight
                pl.BlockSpec((CH_PAD, 1), lambda o, i: (0, 0)),                  # conv bias
                pl.BlockSpec((CH_PAD, NC_PAD), lambda o, i: (0, 0)),             # fc weight
                pl.BlockSpec((1, NC_PAD), lambda o, i: (0, 0)),                  # fc bias
                pl.BlockSpec((TB * HW, TB), lambda o, i: (0, 0)),                # pool matrix
            ],
            out_specs=pl.BlockSpec((1, 8, 128), lambda o, i: (o, 0, 0)),         # per-core partial
            scratch_shapes=[pltpu.VMEM((TB, NC_PAD), jnp.float32)],              # NLL accumulator
        ),
        compiler_params=pltpu.CompilerParams(
            dimension_semantics=("parallel", "arbitrary"),   # outer -> cores, inner carries acc
            vmem_limit_bytes=48 * 1024 * 1024,
        ),
    )(tgt, x, w1t, b1c, w2p, b2c, pmat)

    return jnp.sum(partial[:, 0, 0]) / N


def _reference_forward(x_nchw, targets, w1, b1, w2, b2):
    """Pure-JAX reference mirroring the kernel's precision policy (bf16 matmuls, f32 acc)."""
    N, Cin, H, W = x_nchw.shape
    HW = H * W
    xt = jnp.transpose(x_nchw.reshape(N, Cin, HW), (0, 2, 1)).astype(jnp.bfloat16)  # (N, HW, Cin)
    h = jnp.einsum('nsc,cd->nsd', xt, w1.astype(jnp.bfloat16),
                   preferred_element_type=jnp.float32)
    h = jnp.maximum(h + b1.reshape(1, 1, -1), 0.0)
    pooled = jnp.mean(h.astype(jnp.bfloat16).astype(jnp.float32), axis=1)            # (N, Ch)
    logits = jnp.dot(pooled.astype(jnp.bfloat16), w2.astype(jnp.bfloat16),
                     preferred_element_type=jnp.float32) + b2.reshape(1, -1)
    logp = jax.nn.log_softmax(logits, axis=-1)
    nll = -jnp.take_along_axis(logp, targets[:, None].astype(jnp.int32), axis=-1)[:, 0]
    return jnp.mean(nll)


if __name__ == "__main__":
    # Small NCHW image-classification shapes; N=28 with TB=8 exercises batch
    # padding, multi-step accumulation and the 2-way outer (per-core) split.
    N, Cin, H, W = 28, 4, 16, 16
    CH_HIDDEN = 8
    NUM_CLASSES = 10

    key = jax.random.PRNGKey(0)
    kx, kt, k1, k2, k3, k4 = jax.random.split(key, 6)

    x = jax.random.normal(kx, (N, Cin, H, W), dtype=jnp.float32)
    targets = jax.random.randint(kt, (N,), 0, NUM_CLASSES, dtype=jnp.int32)

    w1 = 0.1 * jax.random.normal(k1, (Cin, CH_HIDDEN), dtype=jnp.float32)
    b1 = 0.05 * jax.random.normal(k2, (CH_HIDDEN,), dtype=jnp.float32)
    w2 = 0.1 * jax.random.normal(k3, (CH_HIDDEN, NUM_CLASSES), dtype=jnp.float32)
    b2 = 0.05 * jax.random.normal(k4, (NUM_CLASSES,), dtype=jnp.float32)

    total_loss = training_box_forward(x, targets, w1, b1, w2, b2,
                                      tile_batch=8, core_splits=2)
    total_loss = jax.block_until_ready(total_loss)

    ref = _reference_forward(x, targets, w1, b1, w2, b2)
    assert jnp.allclose(total_loss, ref, atol=2e-3, rtol=2e-3), (total_loss, ref)

    print("KERNEL_OK")
</pallas_src>

<mosaic_0001>
module attributes {stable_mosaic.version = 11 : i64} {
  func.func @_training_box_kernel(%arg0: i32, %arg1: i32, %arg2: memref<8x1xi32, #tpu.memory_space<vmem>>, %arg3: memref<4x2048xbf16, #tpu.memory_space<vmem>>, %arg4: memref<16x4xbf16, #tpu.memory_space<vmem>>, %arg5: memref<16x1xf32, #tpu.memory_space<vmem>>, %arg6: memref<16x128xbf16, #tpu.memory_space<vmem>>, %arg7: memref<1x128xf32, #tpu.memory_space<vmem>>, %arg8: memref<2048x8xbf16, #tpu.memory_space<vmem>>, %arg9: memref<1x8x128xf32, #tpu.memory_space<vmem>>, %arg10: memref<8x128xf32, #tpu.memory_space<vmem>>) attributes {dimension_semantics = [#tpu.dimension_semantics<parallel>, #tpu.dimension_semantics<arbitrary>], iteration_bounds = array<i64: 2, 2>, scalar_prefetch = 0 : i64, scratch_operands = 1 : i64, tpu.core_type = #tpu.core_type<tc>, window_params = [{transform_indices = @transform_0, window_bounds = array<i64: 8, 1>}, {transform_indices = @transform_1, window_bounds = array<i64: 4, 2048>}, {pipeline_mode = #tpu.pipeline_mode<synchronous>, transform_indices = @transform_2, window_bounds = array<i64: 16, 4>}, {pipeline_mode = #tpu.pipeline_mode<synchronous>, transform_indices = @transform_3, window_bounds = array<i64: 16, 1>}, {pipeline_mode = #tpu.pipeline_mode<synchronous>, transform_indices = @transform_4, window_bounds = array<i64: 16, 128>}, {pipeline_mode = #tpu.pipeline_mode<synchronous>, transform_indices = @transform_5, window_bounds = array<i64: 1, 128>}, {pipeline_mode = #tpu.pipeline_mode<synchronous>, transform_indices = @transform_6, window_bounds = array<i64: 2048, 8>}, {transform_indices = @transform_7, window_bounds = array<i64: 1, 8, 128>}]} {
    %c0_i32 = arith.constant 0 : i32
    %0 = arith.cmpi eq, %arg1, %c0_i32 : i32
    %1 = arith.extui %0 : i1 to i32
    %c0_i32_0 = arith.constant 0 : i32
    %2 = arith.cmpi ne, %1, %c0_i32_0 : i32
    scf.if %2 {
      %cst_27 = arith.constant 0.000000e+00 : f32
      %59 = vector.broadcast %cst_27 : f32 to vector<8x128xf32>
      %c0_28 = arith.constant 0 : index
      %c0_29 = arith.constant 0 : index
      %60 = vector.load %arg10[%c0_28, %c0_29] : memref<8x128xf32, #tpu.memory_space<vmem>>, vector<8x128xf32>
      tpu.vector_store %arg10[%c0_28, %c0_29], %59 {strides = array<i32>} : memref<8x128xf32, #tpu.memory_space<vmem>>, vector<8x128xf32>,
    } else {
    }
    %c0 = arith.constant 0 : index
    %c0_1 = arith.constant 0 : index
    %3 = vector.load %arg4[%c0, %c0_1] : memref<16x4xbf16, #tpu.memory_space<vmem>>, vector<16x4xbf16>
    %c0_2 = arith.constant 0 : index
    %c0_3 = arith.constant 0 : index
    %4 = vector.load %arg3[%c0_2, %c0_3] : memref<4x2048xbf16, #tpu.memory_space<vmem>>, vector<4x2048xbf16>
    %cst = arith.constant dense<0.000000e+00> : vector<16x2048xf32>
    %5 = tpu.matmul %3, %4, %cst {dimension_numbers = #tpu.dot_dimension_numbers<[1], [0], [0], [1], [0, 0, 1, 1], [], []>} : vector<16x4xbf16>, vector<4x2048xbf16>, vector<16x2048xf32> -> vector<16x2048xf32>
    %c0_4 = arith.constant 0 : index
    %c0_5 = arith.constant 0 : index
    %6 = vector.load %arg5[%c0_4, %c0_5] : memref<16x1xf32, #tpu.memory_space<vmem>>, vector<16x1xf32>
    %7 = vector.broadcast %6 : vector<16x1xf32> to vector<16x2048xf32>
    %8 = arith.addf %5, %7 : vector<16x2048xf32>
    %cst_6 = arith.constant 0.000000e+00 : f32
    %9 = vector.broadcast %cst_6 : f32 to vector<16x2048xf32>
    %10 = arith.maximumf %8, %9 : vector<16x2048xf32>
    %11 = arith.truncf %10 : vector<16x2048xf32> to vector<16x2048xbf16>
    %c0_7 = arith.constant 0 : index
    %c0_8 = arith.constant 0 : index
    %12 = vector.load %arg8[%c0_7, %c0_8] : memref<2048x8xbf16, #tpu.memory_space<vmem>>, vector<2048x8xbf16>
    %cst_9 = arith.constant dense<0.000000e+00> : vector<16x8xf32>
    %13 = tpu.matmul %11, %12, %cst_9 {dimension_numbers = #tpu.dot_dimension_numbers<[1], [0], [0], [1], [0, 0, 1, 1], [], []>} : vector<16x2048xbf16>, vector<2048x8xbf16>, vector<16x8xf32> -> vector<16x8xf32>
    %cst_10 = arith.constant 3.906250e-03 : f32
    %14 = vector.broadcast %cst_10 : f32 to vector<16x8xf32>
    %15 = arith.mulf %13, %14 : vector<16x8xf32>
    %16 = arith.truncf %15 : vector<16x8xf32> to vector<16x8xbf16>
    %c0_11 = arith.constant 0 : index
    %c0_12 = arith.constant 0 : index
    %17 = vector.load %arg6[%c0_11, %c0_12] : memref<16x128xbf16, #tpu.memory_space<vmem>>, vector<16x128xbf16>
    %cst_13 = arith.constant dense<0.000000e+00> : vector<8x128xf32>
    %18 = tpu.matmul %16, %17, %cst_13 {dimension_numbers = #tpu.dot_dimension_numbers<[0], [0], [1], [1], [0, 1, 1, 1], [], []>} : vector<16x8xbf16>, vector<16x128xbf16>, vector<8x128xf32> -> vector<8x128xf32>
    %c0_14 = arith.constant 0 : index
    %c0_15 = arith.constant 0 : index
    %19 = vector.load %arg7[%c0_14, %c0_15] : memref<1x128xf32, #tpu.memory_space<vmem>>, vector<1x128xf32>
    %20 = vector.broadcast %19 : vector<1x128xf32> to vector<8x128xf32>
    %21 = arith.addf %18, %20 : vector<8x128xf32>
    %22 = tpu.iota {dimensions = array<i32: 1>} : vector<8x128xi32>
    %23 = tpu.iota {dimensions = array<i32: 0>} : vector<8x1xi32>
    %c10_i32 = arith.constant 10 : i32
    %24 = vector.broadcast %c10_i32 : i32 to vector<8x128xi32>
    %25 = arith.cmpi slt, %22, %24 : vector<8x128xi32>
    %cst_16 = arith.constant -1.000000e+30 : f32
    %26 = vector.broadcast %cst_16 : f32 to vector<8x128xf32>
    %27 = arith.select %25, %21, %26 : vector<8x128xi1>, vector<8x128xf32>
    %cst_17 = arith.constant dense<0xFF800000> : vector<8xf32>
    %28 = vector.multi_reduction <maximumf>, %27, %cst_17 [1] : vector<8x128xf32> to vector<8xf32>
    %29 = vector.shape_cast %28 : vector<8xf32> to vector<8x1xf32>
    %30 = vector.broadcast %29 : vector<8x1xf32> to vector<8x128xf32>
    %31 = arith.subf %27, %30 : vector<8x128xf32>
    %32 = math.exp %31 : vector<8x128xf32>
    %cst_18 = arith.constant dense<0.000000e+00> : vector<8xf32>
    %33 = vector.multi_reduction <add>, %32, %cst_18 [1] : vector<8x128xf32> to vector<8xf32>
    %34 = vector.shape_cast %33 : vector<8xf32> to vector<8x1xf32>
    %35 = math.log %34 : vector<8x1xf32>
    %36 = arith.addf %29, %35 : vector<8x1xf32>
    %c2_i32 = arith.constant 2 : i32
    %37 = arith.muli %arg0, %c2_i32 : i32
    %38 = arith.addi %37, %arg1 : i32
    %c8_i32 = arith.constant 8 : i32
    %39 = arith.muli %38, %c8_i32 : i32
    %40 = vector.broadcast %39 : i32 to vector<8x1xi32>
    %41 = arith.addi %40, %23 : vector<8x1xi32>
    %c28_i32 = arith.constant 28 : i32
    %42 = vector.broadcast %c28_i32 : i32 to vector<8x1xi32>
    %43 = arith.cmpi slt, %41, %42 : vector<8x1xi32>
    %c0_19 = arith.constant 0 : index
    %c0_20 = arith.constant 0 : index
    %44 = vector.load %arg2[%c0_19, %c0_20] : memref<8x1xi32, #tpu.memory_space<vmem>>, vector<8x1xi32>
    %45 = vector.broadcast %44 : vector<8x1xi32> to vector<8x128xi32>
    %46 = arith.cmpi eq, %22, %45 : vector<8x128xi32>
    %c0_21 = arith.constant 0 : index
    %c0_22 = arith.constant 0 : index
    %47 = vector.load %arg10[%c0_21, %c0_22] : memref<8x128xf32, #tpu.memory_space<vmem>>, vector<8x128xf32>
    %48 = vector.broadcast %43 : vector<8x1xi1> to vector<8x128xi1>
    %49 = arith.andi %46, %48 : vector<8x128xi1>
    %50 = vector.broadcast %36 : vector<8x1xf32> to vector<8x128xf32>
    %51 = arith.subf %50, %27 : vector<8x128xf32>
    %cst_23 = arith.constant 0.000000e+00 : f32
    %52 = vector.broadcast %cst_23 : f32 to vector<8x128xf32>
    %53 = arith.select %49, %51, %52 : vector<8x128xi1>, vector<8x128xf32>
    %54 = arith.addf %47, %53 : vector<8x128xf32>
    %c0_24 = arith.constant 0 : index
    %c0_25 = arith.constant 0 : index
    %55 = vector.load %arg10[%c0_24, %c0_25] : memref<8x128xf32, #tpu.memory_space<vmem>>, vector<8x128xf32>
    tpu.vector_store %arg10[%c0_24, %c0_25], %54 {strides = array<i32>} : memref<8x128xf32, #tpu.memory_space<vmem>>, vector<8x128xf32>,
    %c1_i32 = arith.constant 1 : i32
    %56 = arith.cmpi eq, %arg1, %c1_i32 : i32
    %57 = arith.extui %56 : i1 to i32
    %c0_i32_26 = arith.constant 0 : i32
    %58 = arith.cmpi ne, %57, %c0_i32_26 : i32
    scf.if %58 {
      %c0_27 = arith.constant 0 : index
      %c0_28 = arith.constant 0 : index
      %59 = vector.load %arg10[%c0_27, %c0_28] : memref<8x128xf32, #tpu.memory_space<vmem>>, vector<8x128xf32>
      %cst_29 = arith.constant dense<0.000000e+00> : vector<8xf32>
      %60 = vector.multi_reduction <add>, %59, %cst_29 [1] : vector<8x128xf32> to vector<8xf32>
      %61 = vector.shape_cast %60 : vector<8xf32> to vector<8x1xf32>
      %cst_30 = arith.constant dense<0.000000e+00> : vector<1xf32>
      %62 = vector.multi_reduction <add>, %61, %cst_30 [0] : vector<8x1xf32> to vector<1xf32>
      %63 = vector.shape_cast %62 : vector<1xf32> to vector<1x1xf32>
      %cst_31 = arith.constant 0.000000e+00 : f32
      %64 = vector.broadcast %cst_31 : f32 to vector<1x8x128xf32>
      %65 = vector.shape_cast %63 : vector<1x1xf32> to vector<1x1x1xf32>
      %66 = vector.broadcast %65 : vector<1x1x1xf32> to vector<1x8x128xf32>
      %67 = arith.addf %64, %66 : vector<1x8x128xf32>
      %c0_32 = arith.constant 0 : index
      %c0_33 = arith.constant 0 : index
      %c0_34 = arith.constant 0 : index
      %68 = vector.load %arg9[%c0_32, %c0_33, %c0_34] : memref<1x8x128xf32, #tpu.memory_space<vmem>>, vector<1x8x128xf32>
      tpu.vector_store %arg9[%c0_32, %c0_33, %c0_34], %67 {strides = array<i32>} : memref<1x8x128xf32, #tpu.memory_space<vmem>>, vector<1x8x128xf32>,
    } else {
    }
    return
  }
  func.func @transform_0(%arg0: i32, %arg1: i32) -> (i32, i32) {
    %c2_i32 = arith.constant 2 : i32
    %0 = arith.muli %arg0, %c2_i32 : i32
    %1 = arith.addi %0, %arg1 : i32
    %c0_i32 = arith.constant 0 : i32
    %c0_i32_0 = arith.constant 0 : i32
    return %1, %c0_i32 : i32, i32
  }
  func.func @transform_1(%arg0: i32, %arg1: i32) -> (i32, i32) {
    %c2_i32 = arith.constant 2 : i32
    %0 = arith.muli %arg0, %c2_i32 : i32
    %1 = arith.addi %0, %arg1 : i32
    %c0_i32 = arith.constant 0 : i32
    %c0_i32_0 = arith.constant 0 : i32
    return %c0_i32, %1 : i32, i32
  }
  func.func @transform_2(%arg0: i32, %arg1: i32) -> (i32, i32) {
    %c0_i32 = arith.constant 0 : i32
    %c0_i32_0 = arith.constant 0 : i32
    %c0_i32_1 = arith.constant 0 : i32
    return %c0_i32, %c0_i32_0 : i32, i32
  }
  func.func @transform_3(%arg0: i32, %arg1: i32) -> (i32, i32) {
    %c0_i32 = arith.constant 0 : i32
    %c0_i32_0 = arith.constant 0 : i32
    %c0_i32_1 = arith.constant 0 : i32
    return %c0_i32, %c0_i32_0 : i32, i32
  }
  func.func @transform_4(%arg0: i32, %arg1: i32) -> (i32, i32) {
    %c0_i32 = arith.constant 0 : i32
    %c0_i32_0 = arith.constant 0 : i32
    %c0_i32_1 = arith.constant 0 : i32
    return %c0_i32, %c0_i32_0 : i32, i32
  }
  func.func @transform_5(%arg0: i32, %arg1: i32) -> (i32, i32) {
    %c0_i32 = arith.constant 0 : i32
    %c0_i32_0 = arith.constant 0 : i32
    %c0_i32_1 = arith.constant 0 : i32
    return %c0_i32, %c0_i32_0 : i32, i32
  }
  func.func @transform_6(%arg0: i32, %arg1: i32) -> (i32, i32) {
    %c0_i32 = arith.constant 0 : i32
    %c0_i32_0 = arith.constant 0 : i32
    %c0_i32_1 = arith.constant 0 : i32
    return %c0_i32, %c0_i32_0 : i32, i32
  }
  func.func @transform_7(%arg0: i32, %arg1: i32) -> (i32, i32, i32) {
    %c0_i32 = arith.constant 0 : i32
    %c0_i32_0 = arith.constant 0 : i32
    %c0_i32_1 = arith.constant 0 : i32
    return %arg0, %c0_i32, %c0_i32_0 : i32, i32, i32
  }
}

</mosaic_0001>

<llo_original>
// kernel: tpu_custom_call.1
$region0: #{tpu_custom_call.1}
  #allocation0 [shape = 'u32[]', space=smem, size = 0x4, offset = 0x4, fixed_abs, tag = 'smem constant byte address 0x4 - core index']
  #allocation1 [shape = 'u32[72,128]{1,0:T(1,128)}', space=vmem, size = 0x9000, scoped, tag = 'internal scratch']
  #allocation2 [shape = 'f32[8,128]{1,0:T(8,128)}', space=vmem, size = 0x1000, scoped, tag = 'scratch operand']
  %s0 = inlined_call_operand.vmem [shape: s32[32,1], index: 0, kind: input, shape index: {}]
  %s1 = inlined_call_operand.vmem [shape: bf16[4,8192], index: 1, kind: input, shape index: {}]
  %s2 = inlined_call_operand.vmem [shape: bf16[16,4], index: 2, kind: input, shape index: {}]
  %s3 = inlined_call_operand.vmem [shape: f32[16,1], index: 3, kind: input, shape index: {}]
  %s4 = inlined_call_operand.vmem [shape: bf16[16,128], index: 4, kind: input, shape index: {}]
  %s5 = inlined_call_operand.vmem [shape: f32[1,128], index: 5, kind: input, shape index: {}]
  %s6 = inlined_call_operand.vmem [shape: bf16[2048,8], index: 6, kind: input, shape index: {}]
  %s7 = inlined_call_operand.hbm [shape: f32[2,8,128], index: 7, kind: output, shape index: {}]
  %s8 = sld [smem:[#allocation0]]
  $region69: #{tpu_custom_call.1} parent=0
    _
  %s10 = ssub.s32 1, %s8
  %s11 = scalar_select 0, %s10, %s8
  $region1: #{tpu_custom_call.1} parent=0
    #allocation3 [shape = 'u8[8192]{0}', space=vmem, size = 0x2000, scoped, tag = 'output window, operand 0']
    #allocation4 [shape = 's32[2]{0}', space=sflag, size = 0x8, scoped, tag = 'scoped memory for tpu_custom_call.1']
    %12 = vsyncpa [#allocation4], 0
    %s13 = scalar_lea.sflag [#allocation4], 1
    %14 = vsyncpa %s13, 0
    loop: start=0, step=1, limit=6
    $region2: #{tpu_custom_call.1} parent=1 // loop_pre_header
      _
    $region3: #{tpu_custom_call.1} parent=1 // loop_header
      %s16 = sphi 0, %s20
      %p17 = scmp.ge.s32.totalorder %s16, 6
      %s23 = sphi 0, %s35
      %s24 = sphi 0, %s31
      %s25 = sphi 0, %s23
      %s26 = sphi 0, %s24
      %s27 = sphi 0, %s25
      %s28 = sphi 0, %s26
      %s42 = sphi 0, %s44
      %s45 = sphi 0, %s42
      %s46 = sphi 0, %s45
      %s62 = sphi 0, %s46
      %s72 = sphi 0, %s74
      %s75 = sphi 0, %s72
      %s76 = sphi 0, %s75
      %s92 = sphi 0, %s76
      %s96 = sphi 0, %s96
      %s98 = sphi 0, %s96
      %s99 = sphi 0, %s98
      %s113 = sphi 0, %s99
      %s117 = sphi 0, %s117
      %s119 = sphi 0, %s117
      %s120 = sphi 0, %s119
      %s134 = sphi 0, %s120
      %s138 = sphi 0, %s138
      %s140 = sphi 0, %s138
      %s141 = sphi 0, %s140
      %s155 = sphi 0, %s141
      %s159 = sphi 0, %s159
      %s161 = sphi 0, %s159
      %s162 = sphi 0, %s161
      %s176 = sphi 0, %s162
      %s180 = sphi 0, %s180
      %s182 = sphi 0, %s180
      %s183 = sphi 0, %s182
      %s197 = sphi 0, %s183
      %s203 = sphi 0, %s205
      %s206 = sphi 0, %s203
      %s207 = sphi 0, %s206
      %s223 = sphi 0, %s207
    $region4: #{tpu_custom_call.1} parent=1 // loop_header_branch
      %19 = sbr.rel (%p17) target = $region8
    $region5: #{tpu_custom_call.1} parent=1 // loop_body
      %s21 = ssub.s32 %s16, 1
      %s22 = ssub.s32 %s16, 2
      %s29 = sadd.s32 1, %s24
      %p30 = scmp.ge.s32.totalorder %s29, 2
      %s31 = scalar_select %p30, 0, %s29
      %s32 = sadd.s32 1, %s23
      %s33 = scalar_select %p30, %s32, %s23
      %p34 = scmp.ge.s32.totalorder %s33, 2
      %s35 = scalar_select %p34, 0, %s33
      %s36 = smul.u32 %s23, 2
      %s37 = sadd.s32 %s36, %s24
      %s38 = smul.u32 %s35, 2
      %s39 = sadd.s32 %s38, %s31
      %s40 = ssub.s32 %s37, %s39
      %p41 = scmp.eq.s32.totalorder %s40, 0
      %s43 = sadd.s32 %s42, 1
      %s44 = scalar_select %p41, %s42, %s43
      %p47 = pneg %p41
      %p48 = scmp.eq.s32.totalorder %s16, 3
      %p49 = por %p47, %p48
      %p50 = scmp.ne.s32.totalorder %s42, %s45
      %p51 = scmp.eq.s32.totalorder %s16, 0
      %p52 = por %p50, %p51
      %p53 = scmp.ne.s32.totalorder %s42, %s45
      %p54 = scmp.eq.s32.totalorder %s21, 3
      %p55 = por %p53, %p54
      %p56 = scmp.ne.s32.totalorder %s45, %s46
      %p57 = scmp.eq.s32.totalorder %s21, 0
      %p58 = por %p56, %p57
      %p59 = scmp.ne.s32.totalorder %s45, %s46
      %p60 = scmp.eq.s32.totalorder %s22, 3
      %p61 = por %p59, %p60
      %p63 = scmp.ne.s32.totalorder %s46, %s62
      %p64 = scmp.eq.s32.totalorder %s22, 0
      %p65 = por %p63, %p64
      %s66 = smul.u32 %s23, 2
      %s67 = sadd.s32 %s66, %s24
      %s68 = smul.u32 %s35, 2
      %s69 = sadd.s32 %s68, %s31
      %s70 = ssub.s32 %s67, %s69
      %p71 = scmp.eq.s32.totalorder %s70, 0
      %s73 = sadd.s32 %s72, 1
      %s74 = scalar_select %p71, %s72, %s73
      %p77 = pneg %p71
      %p78 = scmp.eq.s32.totalorder %s16, 3
      %p79 = por %p77, %p78
      %p80 = scmp.ne.s32.totalorder %s72, %s75
      %p81 = scmp.eq.s32.totalorder %s16, 0
      %p82 = por %p80, %p81
      %p83 = scmp.ne.s32.totalorder %s72, %s75
      %p84 = scmp.eq.s32.totalorder %s21, 3
      %p85 = por %p83, %p84
      %p86 = scmp.ne.s32.totalorder %s75, %s76
      %p87 = scmp.eq.s32.totalorder %s21, 0
      %p88 = por %p86, %p87
      %p89 = scmp.ne.s32.totalorder %s75, %s76
      %p90 = scmp.eq.s32.totalorder %s22, 3
      %p91 = por %p89, %p90
      %p93 = scmp.ne.s32.totalorder %s76, %s92
      %p94 = scmp.eq.s32.totalorder %s22, 0
      %p95 = por %p93, %p94
      %s97 = sadd.s32 %s96, 1
      %p100 = scmp.eq.s32.totalorder %s16, 3
      %p101 = scmp.ne.s32.totalorder %s96, %s98
      %p102 = scmp.eq.s32.totalorder %s16, 0
      %p103 = por %p101, %p102
      %p104 = scmp.ne.s32.totalorder %s96, %s98
      %p105 = scmp.eq.s32.totalorder %s21, 3
      %p106 = por %p104, %p105
      %p107 = scmp.ne.s32.totalorder %s98, %s99
      %p108 = scmp.eq.s32.totalorder %s21, 0
      %p109 = por %p107, %p108
      %p110 = scmp.ne.s32.totalorder %s98, %s99
      %p111 = scmp.eq.s32.totalorder %s22, 3
      %p112 = por %p110, %p111
      %p114 = scmp.ne.s32.totalorder %s99, %s113
      %p115 = scmp.eq.s32.totalorder %s22, 0
      %p116 = por %p114, %p115
      %s118 = sadd.s32 %s117, 1
      %p121 = scmp.eq.s32.totalorder %s16, 3
      %p122 = scmp.ne.s32.totalorder %s117, %s119
      %p123 = scmp.eq.s32.totalorder %s16, 0
      %p124 = por %p122, %p123
      %p125 = scmp.ne.s32.totalorder %s117, %s119
      %p126 = scmp.eq.s32.totalorder %s21, 3
      %p127 = por %p125, %p126
      %p128 = scmp.ne.s32.totalorder %s119, %s120
      %p129 = scmp.eq.s32.totalorder %s21, 0
      %p130 = por %p128, %p129
      %p131 = scmp.ne.s32.totalorder %s119, %s120
      %p132 = scmp.eq.s32.totalorder %s22, 3
      %p133 = por %p131, %p132
      %p135 = scmp.ne.s32.totalorder %s120, %s134
      %p136 = scmp.eq.s32.totalorder %s22, 0
      %p137 = por %p135, %p136
      %s139 = sadd.s32 %s138, 1
      %p142 = scmp.eq.s32.totalorder %s16, 3
      %p143 = scmp.ne.s32.totalorder %s138, %s140
      %p144 = scmp.eq.s32.totalorder %s16, 0
      %p145 = por %p143, %p144
      %p146 = scmp.ne.s32.totalorder %s138, %s140
      %p147 = scmp.eq.s32.totalorder %s21, 3
      %p148 = por %p146, %p147
      %p149 = scmp.ne.s32.totalorder %s140, %s141
      %p150 = scmp.eq.s32.totalorder %s21, 0
      %p151 = por %p149, %p150
      %p152 = scmp.ne.s32.totalorder %s140, %s141
      %p153 = scmp.eq.s32.totalorder %s22, 3
      %p154 = por %p152, %p153
      %p156 = scmp.ne.s32.totalorder %s141, %s155
      %p157 = scmp.eq.s32.totalorder %s22, 0
      %p158 = por %p156, %p157
      %s160 = sadd.s32 %s159, 1
      %p163 = scmp.eq.s32.totalorder %s16, 3
      %p164 = scmp.ne.s32.totalorder %s159, %s161
      %p165 = scmp.eq.s32.totalorder %s16, 0
      %p166 = por %p164, %p165
      %p167 = scmp.ne.s32.totalorder %s159, %s161
      %p168 = scmp.eq.s32.totalorder %s21, 3
      %p169 = por %p167, %p168
      %p170 = scmp.ne.s32.totalorder %s161, %s162
      %p171 = scmp.eq.s32.totalorder %s21, 0
      %p172 = por %p170, %p171
      %p173 = scmp.ne.s32.totalorder %s161, %s162
      %p174 = scmp.eq.s32.totalorder %s22, 3
      %p175 = por %p173, %p174
      %p177 = scmp.ne.s32.totalorder %s162, %s176
      %p178 = scmp.eq.s32.totalorder %s22, 0
      %p179 = por %p177, %p178
      %s181 = sadd.s32 %s180, 1
      %p184 = scmp.eq.s32.totalorder %s16, 3
      %p185 = scmp.ne.s32.totalorder %s180, %s182
      %p186 = scmp.eq.s32.totalorder %s16, 0
      %p187 = por %p185, %p186
      %p188 = scmp.ne.s32.totalorder %s180, %s182
      %p189 = scmp.eq.s32.totalorder %s21, 3
      %p190 = por %p188, %p189
      %p191 = scmp.ne.s32.totalorder %s182, %s183
      %p192 = scmp.eq.s32.totalorder %s21, 0
      %p193 = por %p191, %p192
      %p194 = scmp.ne.s32.totalorder %s182, %s183
      %p195 = scmp.eq.s32.totalorder %s22, 3
      %p196 = por %p194, %p195
      %p198 = scmp.ne.s32.totalorder %s183, %s197
      %p199 = scmp.eq.s32.totalorder %s22, 0
      %p200 = por %p198, %p199
      %s201 = ssub.s32 %s23, %s35
      %p202 = scmp.eq.s32.totalorder %s201, 0
      %s204 = sadd.s32 %s203, 1
      %s205 = scalar_select %p202, %s203, %s204
      %p208 = pneg %p202
      %p209 = scmp.eq.s32.totalorder %s16, 3
      %p210 = por %p208, %p209
      %p211 = scmp.ne.s32.totalorder %s203, %s206
      %p212 = scmp.eq.s32.totalorder %s16, 0
      %p213 = por %p211, %p212
      %p214 = scmp.ne.s32.totalorder %s203, %s206
      %p215 = scmp.eq.s32.totalorder %s21, 3
      %p216 = por %p214, %p215
      %p217 = scmp.ne.s32.totalorder %s206, %s207
      %p218 = scmp.eq.s32.totalorder %s21, 0
      %p219 = por %p217, %p218
      %p220 = scmp.ne.s32.totalorder %s206, %s207
      %p221 = scmp.eq.s32.totalorder %s22, 3
      %p222 = por %p220, %p221
      %p224 = scmp.ne.s32.totalorder %s207, %s223
      %p225 = scmp.eq.s32.totalorder %s22, 0
      %p226 = por %p224, %p225
      %p227 = scmp.le.s32.totalorder 1, %s16
      %p228 = scmp.lt.s32.totalorder %s16, 5
      %p229 = pnand %p227, %p228
      %p230 = pneg %p229
      // Predicated region
      $region9: #{tpu_custom_call.1} parent=5 // pred_check
        _
      $region10: #{tpu_custom_call.1} parent=5 // pred_check_branch
        %232 = sbr.rel (%p229) target = $region12
      $region11: #{tpu_custom_call.1} parent=5 // pred_region
        %s233 = ssub.s32 %s16, 1
        // Predicated region
        $region13: #{tpu_custom_call.1} parent=11 // pred_check
          %p234 = pneg %p109
        $region14: #{tpu_custom_call.1} parent=11 // pred_check_branch
          %236 = sbr.rel (%p234) target = $region16
        $region15: #{tpu_custom_call.1} parent=11 // pred_region
          _
        $region16: #{tpu_custom_call.1} parent=11 // pred_fallthru
          _
        // Predicated region
        $region17: #{tpu_custom_call.1} parent=11 // pred_check
          %p237 = pneg %p130
        $region18: #{tpu_custom_call.1} parent=11 // pred_check_branch
          %239 = sbr.rel (%p237) target = $region20
        $region19: #{tpu_custom_call.1} parent=11 // pred_region
          _
        $region20: #{tpu_custom_call.1} parent=11 // pred_fallthru
          _
        // Predicated region
        $region21: #{tpu_custom_call.1} parent=11 // pred_check
          %p240 = pneg %p151
        $region22: #{tpu_custom_call.1} parent=11 // pred_check_branch
          %242 = sbr.rel (%p240) target = $region24
        $region23: #{tpu_custom_call.1} parent=11 // pred_region
          _
        $region24: #{tpu_custom_call.1} parent=11 // pred_fallthru
          _
        // Predicated region
        $region25: #{tpu_custom_call.1} parent=11 // pred_check
          %p243 = pneg %p172
        $region26: #{tpu_custom_call.1} parent=11 // pred_check_branch
          %245 = sbr.rel (%p243) target = $region28
        $region27: #{tpu_custom_call.1} parent=11 // pred_region
          _
        $region28: #{tpu_custom_call.1} parent=11 // pred_fallthru
          _
        // Predicated region
        $region29: #{tpu_custom_call.1} parent=11 // pred_check
          %p246 = pneg %p193
        $region30: #{tpu_custom_call.1} parent=11 // pred_check_branch
          %248 = sbr.rel (%p246) target = $region32
        $region31: #{tpu_custom_call.1} parent=11 // pred_region
          _
        $region32: #{tpu_custom_call.1} parent=11 // pred_fallthru
          _
      $region12: #{tpu_custom_call.1} parent=5 // pred_fallthru
        _
      %p249 = scmp.lt.s32.totalorder %s16, 4
      // Predicated region
      $region33: #{tpu_custom_call.1} parent=5 // pred_check
        %p250 = pneg %p249
      $region34: #{tpu_custom_call.1} parent=5 // pred_check_branch
        %252 = sbr.rel (%p250) target = $region36
      $region35: #{tpu_custom_call.1} parent=5 // pred_region
        // Predicated region
        $region37: #{tpu_custom_call.1} parent=35 // pred_check
          %p253 = pneg %p52
        $region38: #{tpu_custom_call.1} parent=35 // pred_check_branch
          %255 = sbr.rel (%p253) target = $region40
        $region39: #{tpu_custom_call.1} parent=35 // pred_region
          %s256 = smul.u32 %s23, 2
          %s257 = sadd.s32 %s256, %s24
          %p258 = scmp.lt.s32.totalorder %s257, 3
          %s259 = scalar_select %p258, %s257, 3
          %s260 = smul.addr %s259, 8
          %s261 = scalar_lea.vmem %s0, %s260
          %s262 = smul.u32 %s23, 2
          %s263 = sadd.s32 %s262, %s24
        $region40: #{tpu_custom_call.1} parent=35 // pred_fallthru
          _
        // Predicated region
        $region41: #{tpu_custom_call.1} parent=35 // pred_check
          %p264 = pneg %p82
        $region42: #{tpu_custom_call.1} parent=35 // pred_check_branch
          %266 = sbr.rel (%p264) target = $region44
        $region43: #{tpu_custom_call.1} parent=35 // pred_region
          %s267 = smul.u32 %s23, 2
          %s268 = sadd.s32 %s267, %s24
          %s269 = smul.u32 16, %s268
          %p270 = scmp.lt.s32.totalorder %s269, 63
          %s271 = scalar_select %p270, %s269, 63
          %s272 = smul.addr %s271, 2
          %s273 = scalar_lea.vmem %s1, %s272
          %s274 = smul.u32 %s23, 2
          %s275 = sadd.s32 %s274, %s24
          %s276 = smul.u32 16, %s275
        $region44: #{tpu_custom_call.1} parent=35 // pred_fallthru
          _
      $region36: #{tpu_custom_call.1} parent=5 // pred_fallthru
        _
      %p277 = scmp.le.s32.totalorder 1, %s16
      %p278 = scmp.lt.s32.totalorder %s16, 5
      %p279 = pnand %p277, %p278
      %p280 = pneg %p279
      // Predicated region
      $region45: #{tpu_custom_call.1} parent=5 // pred_check
        _
      $region46: #{tpu_custom_call.1} parent=5 // pred_check_branch
        %282 = sbr.rel (%p279) target = $region48
      $region47: #{tpu_custom_call.1} parent=5 // pred_region
        %s283 = ssub.s32 %s16, 1
        %s284 = smul.u32 %s25, 2
        %s285 = sadd.s32 %s284, %s26
        %p286 = scmp.lt.s32.totalorder %s285, 3
        %s287 = scalar_select %p286, %s285, 3
        %s288 = smul.addr %s287, 8
        %s289 = scalar_lea.vmem %s0, %s288
        %p290 = pneg %p58
        %p291 = pneg %p55
        %s292 = smul.u32 %s25, 2
        %s293 = sadd.s32 %s292, %s26
        %s294 = smul.u32 16, %s293
        %p295 = scmp.lt.s32.totalorder %s294, 63
        %s296 = scalar_select %p295, %s294, 63
        %s297 = smul.addr %s296, 2
        %s298 = scalar_lea.vmem %s1, %s297
        %p299 = pneg %p88
        %p300 = pneg %p85
        %p301 = pneg %p109
        %p302 = pneg %p106
        %p303 = pneg %p130
        %p304 = pneg %p127
        %p305 = pneg %p151
        %p306 = pneg %p148
        %p307 = pneg %p172
        %p308 = pneg %p169
        %p309 = pneg %p193
        %p310 = pneg %p190
        %p311 = pneg %p219
        %p312 = pneg %p216
        %s313 = sand.u32 %s206, 1
        %s314 = scalar_lea.sflag [#allocation4], %s313
        %s315 = sand.u32 %s206, 1
        %s316 = smul.addr %s315, 8
        %s317 = scalar_lea.vmem [#allocation3], %s316
        %s318 = smul.u32 %s25, 2
        %s319 = sadd.s32 %s318, %s26
        %p320 = scmp.lt.s32.totalorder %s319, 3
        %s321 = scalar_select %p320, %s319, 3
        %s322 = smul.addr %s321, 8
        %s323 = scalar_lea.vmem %s0, %s322
        %s324 = smul.u32 %s25, 2
        %s325 = sadd.s32 %s324, %s26
        %s326 = smul.u32 %s25, 2
        %s327 = sadd.s32 %s326, %s26
        %s328 = smul.u32 16, %s327
        %p329 = scmp.lt.s32.totalorder %s328, 63
        %s330 = scalar_select %p329, %s328, 63
        %s331 = smul.addr %s330, 2
        %s332 = scalar_lea.vmem %s1, %s331
        %s333 = smul.u32 %s25, 2
        %s334 = sadd.s32 %s333, %s26
        %s335 = smul.u32 16, %s334
        %p337 = scmp.eq.s32.totalorder %s26, 0
        // Predicated region
        $region49: #{tpu_custom_call.1} parent=47 // pred_check
          %p338 = pneg %p337
        $region50: #{tpu_custom_call.1} parent=47 // pred_check_branch
          %340 = sbr.rel (%p338) target = $region52
        $region51: #{tpu_custom_call.1} parent=47 // pred_region
          %341 = vst [vmem:[#allocation2] sm:$0xff] 0.0
        $region52: #{tpu_custom_call.1} parent=47 // pred_fallthru
          _
        %v342 = vld [vmem:[%s2] sm:$0xf]
        %v343 = vld [vmem:[%s2 + $0x4] sm:$0xf]
        %v344 = vld [vmem:[%s332] sm:$0xff]
        %v345 = vld [vmem:[%s332 + $0x8] sm:$0xff]
        %v346 = vld [vmem:[%s332 + $0x10] sm:$0xff]
        %v347 = vld [vmem:[%s332 + $0x18] sm:$0xff]
        %v348 = vld [vmem:[%s3] sm:$0xff]
        %v349 = vld [vmem:[%s3 + $0x8] sm:$0xff]
        %351 = vset.pattern.permute.xlu0 0
        %352 = vperm.xlu0 %351, %v348
        %v353 = vpop.permute.xlu0 %352
        %356 = vset.pattern.permute.xlu0 0
        %357 = vperm.xlu0 %356, %v349
        %v358 = vpop.permute.xlu0 %357
        %v362 = vunpack.c.l.b16 %v342
        %v363 = vunpack.c.l.b16 %v343
        %v364 = vpack.c.b16 %v363, %v362
        %366 = vst [vmem:[#allocation1] ss:$4 sm:$0xff] %v344
        %s368 = scalar_lea.vmem [#allocation1], 32
        %369 = vst [vmem:[%s368] ss:$4 sm:$0xff] %v345
        %v370 = vld.sshfl [vmem:[#allocation1] sm:$0xff pattern:$0x73625140]
        %v371 = vld.sshfl [vmem:[#allocation1 + $0x8] sm:$0xff pattern:$0x73625140]
        %v372 = vld.sshfl [vmem:[#allocation1 + $0x10] sm:$0xff pattern:$0x73625140]
        %v373 = vld.sshfl [vmem:[#allocation1 + $0x18] sm:$0xff pattern:$0x73625140]
        %v374 = vld.sshfl [vmem:[#allocation1 + $0x20] sm:$0xff pattern:$0x73625140]
        %v375 = vld.sshfl [vmem:[#allocation1 + $0x28] sm:$0xff pattern:$0x73625140]
        %v376 = vld.sshfl [vmem:[#allocation1 + $0x30] sm:$0xff pattern:$0x73625140]
        %v377 = vld.sshfl [vmem:[#allocation1 + $0x38] sm:$0xff pattern:$0x73625140]
        %379 = vst [vmem:[#allocation1] ss:$4 sm:$0xff] %v346
        %381 = vst [vmem:[%s368] ss:$4 sm:$0xff] %v347
        %v382 = vld.sshfl [vmem:[#allocation1] sm:$0xff pattern:$0x73625140]
        %v383 = vld.sshfl [vmem:[#allocation1 + $0x8] sm:$0xff pattern:$0x73625140]
        %v384 = vld.sshfl [vmem:[#allocation1 + $0x10] sm:$0xff pattern:$0x73625140]
        %v385 = vld.sshfl [vmem:[#allocation1 + $0x18] sm:$0xff pattern:$0x73625140]
        %v386 = vld.sshfl [vmem:[#allocation1 + $0x20] sm:$0xff pattern:$0x73625140]
        %v387 = vld.sshfl [vmem:[#allocation1 + $0x28] sm:$0xff pattern:$0x73625140]
        %v388 = vld.sshfl [vmem:[#allocation1 + $0x30] sm:$0xff pattern:$0x73625140]
        %v389 = vld.sshfl [vmem:[#allocation1 + $0x38] sm:$0xff pattern:$0x73625140]
        %vm390 = vcmask 31744
        %v392 = vsel %vm390, %v364, 0
        %vm394 = vcmask 1041408
        %v395 = vsel %vm394, %v370, 0
        %v397 = vsel %vm394, %v371, 0
        %v399 = vsel %vm394, %v372, 0
        %v401 = vsel %vm394, %v373, 0
        %v403 = vsel %vm394, %v374, 0
        %v405 = vsel %vm394, %v375, 0
        %v407 = vsel %vm394, %v376, 0
        %v409 = vsel %vm394, %v377, 0
        %v411 = vsel %vm394, %v382, 0
        %v413 = vsel %vm394, %v383, 0
        %v415 = vsel %vm394, %v384, 0
        %v417 = vsel %vm394, %v385, 0
        %v419 = vsel %vm394, %v386, 0
        %v421 = vsel %vm394, %v387, 0
        %v423 = vsel %vm394, %v388, 0
        %v425 = vsel %vm394, %v389, 0
        %427 = vmatpush.bf16.msra.mxu0 0
        %428 = vmatpush.bf16.msra.mxu0 0
        %429 = vmatpush.bf16.msra.mxu0 0
        %430 = vmatpush.bf16.msra.mxu0 0
        %431 = vmatpush.bf16.msra.mxu0 0
        %432 = vmatpush.bf16.msra.mxu0 0
        %433 = vmatpush.bf16.msra.mxu0 0
        %434 = vmatpush.bf16.msra.mxu0 %v395
        %435 = vmatmul.bf16.gmra.mxu0 %v392
        %v436 = vpop.f32.mrf.mxu0
        %v437 = vadd.f32 %v353, %v436
        %v438 = vpop.f32.mrf.mxu0
        %v439 = vadd.f32 %v358, %v438
        %440 = vdwg.mxu0
        %441 = vmatpush.bf16.msra.mxu0 0
        %442 = vmatpush.bf16.msra.mxu0 0
        %443 = vmatpush.bf16.msra.mxu0 0
        %444 = vmatpush.bf16.msra.mxu0 0
        %445 = vmatpush.bf16.msra.mxu0 0
        %446 = vmatpush.bf16.msra.mxu0 0
        %447 = vmatpush.bf16.msra.mxu0 0
        %448 = vmatpush.bf16.msra.mxu0 %v397
        %449 = vmatmul.bf16.gmra.mxu0 %v392
        %v450 = vpop.f32.mrf.mxu0
        %v451 = vadd.f32 %v353, %v450
        %v452 = vpop.f32.mrf.mxu0
        %v453 = vadd.f32 %v358, %v452
        %454 = vdwg.mxu0
        %455 = vmatpush.bf16.msra.mxu0 0
        %456 = vmatpush.bf16.msra.mxu0 0
        %457 = vmatpush.bf16.msra.mxu0 0
        %458 = vmatpush.bf16.msra.mxu0 0
        %459 = vmatpush.bf16.msra.mxu0 0
        %460 = vmatpush.bf16.msra.mxu0 0
        %461 = vmatpush.bf16.msra.mxu0 0
        %462 = vmatpush.bf16.msra.mxu0 %v399
        %463 = vmatmul.bf16.gmra.mxu0 %v392
        %v464 = vpop.f32.mrf.mxu0
        %v465 = vadd.f32 %v353, %v464
        %v466 = vpop.f32.mrf.mxu0
        %v467 = vadd.f32 %v358, %v466
        %468 = vdwg.mxu0
        %469 = vmatpush.bf16.msra.mxu0 0
        %470 = vmatpush.bf16.msra.mxu0 0
        %471 = vmatpush.bf16.msra.mxu0 0
        %472 = vmatpush.bf16.msra.mxu0 0
        %473 = vmatpush.bf16.msra.mxu0 0
        %474 = vmatpush.bf16.msra.mxu0 0
        %475 = vmatpush.bf16.msra.mxu0 0
        %476 = vmatpush.bf16.msra.mxu0 %v401
        %477 = vmatmul.bf16.gmra.mxu0 %v392
        %v478 = vpop.f32.mrf.mxu0
        %v479 = vadd.f32 %v353, %v478
        %v480 = vpop.f32.mrf.mxu0
        %v481 = vadd.f32 %v358, %v480
        %482 = vdwg.mxu0
        %483 = vmatpush.bf16.msra.mxu0 0
        %484 = vmatpush.bf16.msra.mxu0 0
        %485 = vmatpush.bf16.msra.mxu0 0
        %486 = vmatpush.bf16.msra.mxu0 0
        %487 = vmatpush.bf16.msra.mxu0 0
        %488 = vmatpush.bf16.msra.mxu0 0
        %489 = vmatpush.bf16.msra.mxu0 0
        %490 = vmatpush.bf16.msra.mxu0 %v403
        %491 = vmatmul.bf16.gmra.mxu0 %v392
        %v492 = vpop.f32.mrf.mxu0
        %v493 = vadd.f32 %v353, %v492
        %v494 = vpop.f32.mrf.mxu0
        %v495 = vadd.f32 %v358, %v494
        %496 = vdwg.mxu0
        %497 = vmatpush.bf16.msra.mxu0 0
        %498 = vmatpush.bf16.msra.mxu0 0
        %499 = vmatpush.bf16.msra.mxu0 0
        %500 = vmatpush.bf16.msra.mxu0 0
        %501 = vmatpush.bf16.msra.mxu0 0
        %502 = vmatpush.bf16.msra.mxu0 0
        %503 = vmatpush.bf16.msra.mxu0 0
        %504 = vmatpush.bf16.msra.mxu0 %v405
        %505 = vmatmul.bf16.gmra.mxu0 %v392
        %v506 = vpop.f32.mrf.mxu0
        %v507 = vadd.f32 %v353, %v506
        %v508 = vpop.f32.mrf.mxu0
        %v509 = vadd.f32 %v358, %v508
        %510 = vdwg.mxu0
        %511 = vmatpush.bf16.msra.mxu0 0
        %512 = vmatpush.bf16.msra.mxu0 0
        %513 = vmatpush.bf16.msra.mxu0 0
        %514 = vmatpush.bf16.msra.mxu0 0
        %515 = vmatpush.bf16.msra.mxu0 0
        %516 = vmatpush.bf16.msra.mxu0 0
        %517 = vmatpush.bf16.msra.mxu0 0
        %518 = vmatpush.bf16.msra.mxu0 %v407
        %519 = vmatmul.bf16.gmra.mxu0 %v392
        %v520 = vpop.f32.mrf.mxu0
        %v521 = vadd.f32 %v353, %v520
        %v522 = vpop.f32.mrf.mxu0
        %v523 = vadd.f32 %v358, %v522
        %524 = vdwg.mxu0
        %525 = vmatpush.bf16.msra.mxu0 0
        %526 = vmatpush.bf16.msra.mxu0 0
        %527 = vmatpush.bf16.msra.mxu0 0
        %528 = vmatpush.bf16.msra.mxu0 0
        %529 = vmatpush.bf16.msra.mxu0 0
        %530 = vmatpush.bf16.msra.mxu0 0
        %531 = vmatpush.bf16.msra.mxu0 0
        %532 = vmatpush.bf16.msra.mxu0 %v409
        %533 = vmatmul.bf16.gmra.mxu0 %v392
        %v534 = vpop.f32.mrf.mxu0
        %v535 = vadd.f32 %v353, %v534
        %v536 = vpop.f32.mrf.mxu0
        %v537 = vadd.f32 %v358, %v536
        %538 = vdwg.mxu0
        %539 = vmatpush.bf16.msra.mxu0 0
        %540 = vmatpush.bf16.msra.mxu0 0
        %541 = vmatpush.bf16.msra.mxu0 0
        %542 = vmatpush.bf16.msra.mxu0 0
        %543 = vmatpush.bf16.msra.mxu0 0
        %544 = vmatpush.bf16.msra.mxu0 0
        %545 = vmatpush.bf16.msra.mxu0 0
        %546 = vmatpush.bf16.msra.mxu0 %v411
        %547 = vmatmul.bf16.gmra.mxu0 %v392
        %v548 = vpop.f32.mrf.mxu0
        %v549 = vadd.f32 %v353, %v548
        %v550 = vpop.f32.mrf.mxu0
        %v551 = vadd.f32 %v358, %v550
        %552 = vdwg.mxu0
        %553 = vmatpush.bf16.msra.mxu0 0
        %554 = vmatpush.bf16.msra.mxu0 0
        %555 = vmatpush.bf16.msra.mxu0 0
        %556 = vmatpush.bf16.msra.mxu0 0
        %557 = vmatpush.bf16.msra.mxu0 0
        %558 = vmatpush.bf16.msra.mxu0 0
        %559 = vmatpush.bf16.msra.mxu0 0
        %560 = vmatpush.bf16.msra.mxu0 %v413
        %561 = vmatmul.bf16.gmra.mxu0 %v392
        %v562 = vpop.f32.mrf.mxu0
        %v563 = vadd.f32 %v353, %v562
        %v564 = vpop.f32.mrf.mxu0
        %v565 = vadd.f32 %v358, %v564
        %566 = vdwg.mxu0
        %567 = vmatpush.bf16.msra.mxu0 0
        %568 = vmatpush.bf16.msra.mxu0 0
        %569 = vmatpush.bf16.msra.mxu0 0
        %570 = vmatpush.bf16.msra.mxu0 0
        %571 = vmatpush.bf16.msra.mxu0 0
        %572 = vmatpush.bf16.msra.mxu0 0
        %573 = vmatpush.bf16.msra.mxu0 0
        %574 = vmatpush.bf16.msra.mxu0 %v415
        %575 = vmatmul.bf16.gmra.mxu0 %v392
        %v576 = vpop.f32.mrf.mxu0
        %v577 = vadd.f32 %v353, %v576
        %v578 = vpop.f32.mrf.mxu0
        %v579 = vadd.f32 %v358, %v578
        %580 = vdwg.mxu0
        %581 = vmatpush.bf16.msra.mxu0 0
        %582 = vmatpush.bf16.msra.mxu0 0
        %583 = vmatpush.bf16.msra.mxu0 0
        %584 = vmatpush.bf16.msra.mxu0 0
        %585 = vmatpush.bf16.msra.mxu0 0
        %586 = vmatpush.bf16.msra.mxu0 0
        %587 = vmatpush.bf16.msra.mxu0 0
        %588 = vmatpush.bf16.msra.mxu0 %v417
        %589 = vmatmul.bf16.gmra.mxu0 %v392
        %v590 = vpop.f32.mrf.mxu0
        %v591 = vadd.f32 %v353, %v590
        %v592 = vpop.f32.mrf.mxu0
        %v593 = vadd.f32 %v358, %v592
        %594 = vdwg.mxu0
        %595 = vmatpush.bf16.msra.mxu0 0
        %596 = vmatpush.bf16.msra.mxu0 0
        %597 = vmatpush.bf16.msra.mxu0 0
        %598 = vmatpush.bf16.msra.mxu0 0
        %599 = vmatpush.bf16.msra.mxu0 0
        %600 = vmatpush.bf16.msra.mxu0 0
        %601 = vmatpush.bf16.msra.mxu0 0
        %602 = vmatpush.bf16.msra.mxu0 %v419
        %603 = vmatmul.bf16.gmra.mxu0 %v392
        %v604 = vpop.f32.mrf.mxu0
        %v605 = vadd.f32 %v353, %v604
        %v606 = vpop.f32.mrf.mxu0
        %v607 = vadd.f32 %v358, %v606
        %608 = vdwg.mxu0
        %609 = vmatpush.bf16.msra.mxu0 0
        %610 = vmatpush.bf16.msra.mxu0 0
        %611 = vmatpush.bf16.msra.mxu0 0
        %612 = vmatpush.bf16.msra.mxu0 0
        %613 = vmatpush.bf16.msra.mxu0 0
        %614 = vmatpush.bf16.msra.mxu0 0
        %615 = vmatpush.bf16.msra.mxu0 0
        %616 = vmatpush.bf16.msra.mxu0 %v421
        %617 = vmatmul.bf16.gmra.mxu0 %v392
        %v618 = vpop.f32.mrf.mxu0
        %v619 = vadd.f32 %v353, %v618
        %v620 = vpop.f32.mrf.mxu0
        %v621 = vadd.f32 %v358, %v620
        %622 = vdwg.mxu0
        %623 = vmatpush.bf16.msra.mxu0 0
        %624 = vmatpush.bf16.msra.mxu0 0
        %625 = vmatpush.bf16.msra.mxu0 0
        %626 = vmatpush.bf16.msra.mxu0 0
        %627 = vmatpush.bf16.msra.mxu0 0
        %628 = vmatpush.bf16.msra.mxu0 0
        %629 = vmatpush.bf16.msra.mxu0 0
        %630 = vmatpush.bf16.msra.mxu0 %v423
        %631 = vmatmul.bf16.gmra.mxu0 %v392
        %v632 = vpop.f32.mrf.mxu0
        %v633 = vadd.f32 %v353, %v632
        %v634 = vpop.f32.mrf.mxu0
        %v635 = vadd.f32 %v358, %v634
        %636 = vdwg.mxu0
        %637 = vmatpush.bf16.msra.mxu0 0
        %638 = vmatpush.bf16.msra.mxu0 0
        %639 = vmatpush.bf16.msra.mxu0 0
        %640 = vmatpush.bf16.msra.mxu0 0
        %641 = vmatpush.bf16.msra.mxu0 0
        %642 = vmatpush.bf16.msra.mxu0 0
        %643 = vmatpush.bf16.msra.mxu0 0
        %644 = vmatpush.bf16.msra.mxu0 %v425
        %645 = vmatmul.bf16.gmra.mxu0 %v392
        %v646 = vpop.f32.mrf.mxu0
        %v647 = vadd.f32 %v353, %v646
        %v648 = vpop.f32.mrf.mxu0
        %v649 = vadd.f32 %v358, %v648
        %650 = vdwg.mxu0
        %v651 = vmax.f32 %v437, 0.0
        %v652 = vmax.f32 %v451, 0.0
        %v653 = vmax.f32 %v465, 0.0
        %v654 = vmax.f32 %v479, 0.0
        %v655 = vmax.f32 %v493, 0.0
        %v656 = vmax.f32 %v507, 0.0
        %v657 = vmax.f32 %v521, 0.0
        %v658 = vmax.f32 %v535, 0.0
        %v659 = vmax.f32 %v549, 0.0
        %v660 = vmax.f32 %v563, 0.0
        %v661 = vmax.f32 %v577, 0.0
        %v662 = vmax.f32 %v591, 0.0
        %v663 = vmax.f32 %v605, 0.0
        %v664 = vmax.f32 %v619, 0.0
        %v665 = vmax.f32 %v633, 0.0
        %v666 = vmax.f32 %v647, 0.0
        %v667 = vmax.f32 %v439, 0.0
        %v668 = vmax.f32 %v453, 0.0
        %v669 = vmax.f32 %v467, 0.0
        %v670 = vmax.f32 %v481, 0.0
        %v671 = vmax.f32 %v495, 0.0
        %v672 = vmax.f32 %v509, 0.0
        %v673 = vmax.f32 %v523, 0.0
        %v674 = vmax.f32 %v537, 0.0
        %v675 = vmax.f32 %v551, 0.0
        %v676 = vmax.f32 %v565, 0.0
        %v677 = vmax.f32 %v579, 0.0
        %v678 = vmax.f32 %v593, 0.0
        %v679 = vmax.f32 %v607, 0.0
        %v680 = vmax.f32 %v621, 0.0
        %v681 = vmax.f32 %v635, 0.0
        %v682 = vmax.f32 %v649, 0.0
        %v683 = vpack.c.bf16 %v667, %v651
        %v684 = vpack.c.bf16 %v668, %v652
        %v685 = vpack.c.bf16 %v669, %v653
        %v686 = vpack.c.bf16 %v670, %v654
        %v687 = vpack.c.bf16 %v671, %v655
        %v688 = vpack.c.bf16 %v672, %v656
        %v689 = vpack.c.bf16 %v673, %v657
        %v690 = vpack.c.bf16 %v674, %v658
        %v691 = vpack.c.bf16 %v675, %v659
        %v692 = vpack.c.bf16 %v676, %v660
        %v693 = vpack.c.bf16 %v677, %v661
        %v694 = vpack.c.bf16 %v678, %v662
        %v695 = vpack.c.bf16 %v679, %v663
        %v696 = vpack.c.bf16 %v680, %v664
        %v697 = vpack.c.bf16 %v681, %v665
        %v698 = vpack.c.bf16 %v682, %v666
        %v699 = vld [vmem:[%s6] sm:$0xf]
        %v700 = vld [vmem:[%s6 + $0x4] sm:$0xf]
        %v701 = vld [vmem:[%s6 + $0x8] sm:$0xf]
        %v702 = vld [vmem:[%s6 + $0xc] sm:$0xf]
        %v703 = vld [vmem:[%s6 + $0x10] sm:$0xf]
        %v704 = vld [vmem:[%s6 + $0x14] sm:$0xf]
        %v705 = vld [vmem:[%s6 + $0x18] sm:$0xf]
        %v706 = vld [vmem:[%s6 + $0x1c] sm:$0xf]
        %v707 = vld [vmem:[%s6 + $0x20] sm:$0xf]
        %v708 = vld [vmem:[%s6 + $0x24] sm:$0xf]
        %v709 = vld [vmem:[%s6 + $0x28] sm:$0xf]
        %v710 = vld [vmem:[%s6 + $0x2c] sm:$0xf]
        %v711 = vld [vmem:[%s6 + $0x30] sm:$0xf]
        %v712 = vld [vmem:[%s6 + $0x34] sm:$0xf]
        %v713 = vld [vmem:[%s6 + $0x38] sm:$0xf]
        %v714 = vld [vmem:[%s6 + $0x3c] sm:$0xf]
        %v715 = vld [vmem:[%s6 + $0x40] sm:$0xf]
        %v716 = vld [vmem:[%s6 + $0x44] sm:$0xf]
        %v717 = vld [vmem:[%s6 + $0x48] sm:$0xf]
        %v718 = vld [vmem:[%s6 + $0x4c] sm:$0xf]
        %v719 = vld [vmem:[%s6 + $0x50] sm:$0xf]
        %v720 = vld [vmem:[%s6 + $0x54] sm:$0xf]
        %v721 = vld [vmem:[%s6 + $0x58] sm:$0xf]
        %v722 = vld [vmem:[%s6 + $0x5c] sm:$0xf]
        %v723 = vld [vmem:[%s6 + $0x60] sm:$0xf]
        %v724 = vld [vmem:[%s6 + $0x64] sm:$0xf]
        %v725 = vld [vmem:[%s6 + $0x68] sm:$0xf]
        %v726 = vld [vmem:[%s6 + $0x6c] sm:$0xf]
        %v727 = vld [vmem:[%s6 + $0x70] sm:$0xf]
        %v728 = vld [vmem:[%s6 + $0x74] sm:$0xf]
        %v729 = vld [vmem:[%s6 + $0x78] sm:$0xf]
        %v730 = vld [vmem:[%s6 + $0x7c] sm:$0xf]
        %v731 = vld [vmem:[%s6 + $0x80] sm:$0xf]
        %v732 = vld [vmem:[%s6 + $0x84] sm:$0xf]
        %v733 = vld [vmem:[%s6 + $0x88] sm:$0xf]
        %v734 = vld [vmem:[%s6 + $0x8c] sm:$0xf]
        %v735 = vld [vmem:[%s6 + $0x90] sm:$0xf]
        %v736 = vld [vmem:[%s6 + $0x94] sm:$0xf]
        %v737 = vld [vmem:[%s6 + $0x98] sm:$0xf]
        %v738 = vld [vmem:[%s6 + $0x9c] sm:$0xf]
        %v739 = vld [vmem:[%s6 + $0xa0] sm:$0xf]
        %v740 = vld [vmem:[%s6 + $0xa4] sm:$0xf]
        %v741 = vld [vmem:[%s6 + $0xa8] sm:$0xf]
        %v742 = vld [vmem:[%s6 + $0xac] sm:$0xf]
        %v743 = vld [vmem:[%s6 + $0xb0] sm:$0xf]
        %v744 = vld [vmem:[%s6 + $0xb4] sm:$0xf]
        %v745 = vld [vmem:[%s6 + $0xb8] sm:$0xf]
        %v746 = vld [vmem:[%s6 + $0xbc] sm:$0xf]
        %v747 = vld [vmem:[%s6 + $0xc0] sm:$0xf]
        %v748 = vld [vmem:[%s6 + $0xc4] sm:$0xf]
        %v749 = vld [vmem:[%s6 + $0xc8] sm:$0xf]
        %v750 = vld [vmem:[%s6 + $0xcc] sm:$0xf]
        %v751 = vld [vmem:[%s6 + $0xd0] sm:$0xf]
        %v752 = vld [vmem:[%s6 + $0xd4] sm:$0xf]
        %v753 = vld [vmem:[%s6 + $0xd8] sm:$0xf]
        %v754 = vld [vmem:[%s6 + $0xdc] sm:$0xf]
        %v755 = vld [vmem:[%s6 + $0xe0] sm:$0xf]
        %v756 = vld [vmem:[%s6 + $0xe4] sm:$0xf]
        %v757 = vld [vmem:[%s6 + $0xe8] sm:$0xf]
        %v758 = vld [vmem:[%s6 + $0xec] sm:$0xf]
        %v759 = vld [vmem:[%s6 + $0xf0] sm:$0xf]
        %v760 = vld [vmem:[%s6 + $0xf4] sm:$0xf]
        %v761 = vld [vmem:[%s6 + $0xf8] sm:$0xf]
        %v762 = vld [vmem:[%s6 + $0xfc] sm:$0xf]
        %v763 = vld [vmem:[%s6 + $0x100] sm:$0xf]
        %v764 = vld [vmem:[%s6 + $0x104] sm:$0xf]
        %v765 = vld [vmem:[%s6 + $0x108] sm:$0xf]
        %v766 = vld [vmem:[%s6 + $0x10c] sm:$0xf]
        %v767 = vld [vmem:[%s6 + $0x110] sm:$0xf]
        %v768 = vld [vmem:[%s6 + $0x114] sm:$0xf]
        %v769 = vld [vmem:[%s6 + $0x118] sm:$0xf]
        %v770 = vld [vmem:[%s6 + $0x11c] sm:$0xf]
        %v771 = vld [vmem:[%s6 + $0x120] sm:$0xf]
        %v772 = vld [vmem:[%s6 + $0x124] sm:$0xf]
        %v773 = vld [vmem:[%s6 + $0x128] sm:$0xf]
        %v774 = vld [vmem:[%s6 + $0x12c] sm:$0xf]
        %v775 = vld [vmem:[%s6 + $0x130] sm:$0xf]
        %v776 = vld [vmem:[%s6 + $0x134] sm:$0xf]
        %v777 = vld [vmem:[%s6 + $0x138] sm:$0xf]
        %v778 = vld [vmem:[%s6 + $0x13c] sm:$0xf]
        %v779 = vld [vmem:[%s6 + $0x140] sm:$0xf]
        %v780 = vld [vmem:[%s6 + $0x144] sm:$0xf]
        %v781 = vld [vmem:[%s6 + $0x148] sm:$0xf]
        %v782 = vld [vmem:[%s6 + $0x14c] sm:$0xf]
        %v783 = vld [vmem:[%s6 + $0x150] sm:$0xf]
        %v784 = vld [vmem:[%s6 + $0x154] sm:$0xf]
        %v785 = vld [vmem:[%s6 + $0x158] sm:$0xf]
        %v786 = vld [vmem:[%s6 + $0x15c] sm:$0xf]
        %v787 = vld [vmem:[%s6 + $0x160] sm:$0xf]
        %v788 = vld [vmem:[%s6 + $0x164] sm:$0xf]
        %v789 = vld [vmem:[%s6 + $0x168] sm:$0xf]
        %v790 = vld [vmem:[%s6 + $0x16c] sm:$0xf]
        %v791 = vld [vmem:[%s6 + $0x170] sm:$0xf]
        %v792 = vld [vmem:[%s6 + $0x174] sm:$0xf]
        %v793 = vld [vmem:[%s6 + $0x178] sm:$0xf]
        %v794 = vld [vmem:[%s6 + $0x17c] sm:$0xf]
        %v795 = vld [vmem:[%s6 + $0x180] sm:$0xf]
        %v796 = vld [vmem:[%s6 + $0x184] sm:$0xf]
        %v797 = vld [vmem:[%s6 + $0x188] sm:$0xf]
        %v798 = vld [vmem:[%s6 + $0x18c] sm:$0xf]
        %v799 = vld [vmem:[%s6 + $0x190] sm:$0xf]
        %v800 = vld [vmem:[%s6 + $0x194] sm:$0xf]
        %v801 = vld [vmem:[%s6 + $0x198] sm:$0xf]
        %v802 = vld [vmem:[%s6 + $0x19c] sm:$0xf]
        %v803 = vld [vmem:[%s6 + $0x1a0] sm:$0xf]
        %v804 = vld [vmem:[%s6 + $0x1a4] sm:$0xf]
        %v805 = vld [vmem:[%s6 + $0x1a8] sm:$0xf]
        %v806 = vld [vmem:[%s6 + $0x1ac] sm:$0xf]
        %v807 = vld [vmem:[%s6 + $0x1b0] sm:$0xf]
        %v808 = vld [vmem:[%s6 + $0x1b4] sm:$0xf]
        %v809 = vld [vmem:[%s6 + $0x1b8] sm:$0xf]
        %v810 = vld [vmem:[%s6 + $0x1bc] sm:$0xf]
        %v811 = vld [vmem:[%s6 + $0x1c0] sm:$0xf]
        %v812 = vld [vmem:[%s6 + $0x1c4] sm:$0xf]
        %v813 = vld [vmem:[%s6 + $0x1c8] sm:$0xf]
        %v814 = vld [vmem:[%s6 + $0x1cc] sm:$0xf]
        %v815 = vld [vmem:[%s6 + $0x1d0] sm:$0xf]
        %v816 = vld [vmem:[%s6 + $0x1d4] sm:$0xf]
        %v817 = vld [vmem:[%s6 + $0x1d8] sm:$0xf]
        %v818 = vld [vmem:[%s6 + $0x1dc] sm:$0xf]
        %v819 = vld [vmem:[%s6 + $0x1e0] sm:$0xf]
        %v820 = vld [vmem:[%s6 + $0x1e4] sm:$0xf]
        %v821 = vld [vmem:[%s6 + $0x1e8] sm:$0xf]
        %v822 = vld [vmem:[%s6 + $0x1ec] sm:$0xf]
        %v823 = vld [vmem:[%s6 + $0x1f0] sm:$0xf]
        %v824 = vld [vmem:[%s6 + $0x1f4] sm:$0xf]
        %v825 = vld [vmem:[%s6 + $0x1f8] sm:$0xf]
        %v826 = vld [vmem:[%s6 + $0x1fc] sm:$0xf]
        %v827 = vld [vmem:[%s6 + $0x200] sm:$0xf]
        %v828 = vld [vmem:[%s6 + $0x204] sm:$0xf]
        %v829 = vld [vmem:[%s6 + $0x208] sm:$0xf]
        %v830 = vld [vmem:[%s6 + $0x20c] sm:$0xf]
        %v831 = vld [vmem:[%s6 + $0x210] sm:$0xf]
        %v832 = vld [vmem:[%s6 + $0x214] sm:$0xf]
        %v833 = vld [vmem:[%s6 + $0x218] sm:$0xf]
        %v834 = vld [vmem:[%s6 + $0x21c] sm:$0xf]
        %v835 = vld [vmem:[%s6 + $0x220] sm:$0xf]
        %v836 = vld [vmem:[%s6 + $0x224] sm:$0xf]
        %v837 = vld [vmem:[%s6 + $0x228] sm:$0xf]
        %v838 = vld [vmem:[%s6 + $0x22c] sm:$0xf]
        %v839 = vld [vmem:[%s6 + $0x230] sm:$0xf]
        %v840 = vld [vmem:[%s6 + $0x234] sm:$0xf]
        %v841 = vld [vmem:[%s6 + $0x238] sm:$0xf]
        %v842 = vld [vmem:[%s6 + $0x23c] sm:$0xf]
        %v843 = vld [vmem:[%s6 + $0x240] sm:$0xf]
        %v844 = vld [vmem:[%s6 + $0x244] sm:$0xf]
        %v845 = vld [vmem:[%s6 + $0x248] sm:$0xf]
        %v846 = vld [vmem:[%s6 + $0x24c] sm:$0xf]
        %v847 = vld [vmem:[%s6 + $0x250] sm:$0xf]
        %v848 = vld [vmem:[%s6 + $0x254] sm:$0xf]
        %v849 = vld [vmem:[%s6 + $0x258] sm:$0xf]
        %v850 = vld [vmem:[%s6 + $0x25c] sm:$0xf]
        %v851 = vld [vmem:[%s6 + $0x260] sm:$0xf]
        %v852 = vld [vmem:[%s6 + $0x264] sm:$0xf]
        %v853 = vld [vmem:[%s6 + $0x268] sm:$0xf]
        %v854 = vld [vmem:[%s6 + $0x26c] sm:$0xf]
        %v855 = vld [vmem:[%s6 + $0x270] sm:$0xf]
        %v856 = vld [vmem:[%s6 + $0x274] sm:$0xf]
        %v857 = vld [vmem:[%s6 + $0x278] sm:$0xf]
        %v858 = vld [vmem:[%s6 + $0x27c] sm:$0xf]
        %v859 = vld [vmem:[%s6 + $0x280] sm:$0xf]
        %v860 = vld [vmem:[%s6 + $0x284] sm:$0xf]
        %v861 = vld [vmem:[%s6 + $0x288] sm:$0xf]
        %v862 = vld [vmem:[%s6 + $0x28c] sm:$0xf]
        %v863 = vld [vmem:[%s6 + $0x290] sm:$0xf]
        %v864 = vld [vmem:[%s6 + $0x294] sm:$0xf]
        %v865 = vld [vmem:[%s6 + $0x298] sm:$0xf]
        %v866 = vld [vmem:[%s6 + $0x29c] sm:$0xf]
        %v867 = vld [vmem:[%s6 + $0x2a0] sm:$0xf]
        %v868 = vld [vmem:[%s6 + $0x2a4] sm:$0xf]
        %v869 = vld [vmem:[%s6 + $0x2a8] sm:$0xf]
        %v870 = vld [vmem:[%s6 + $0x2ac] sm:$0xf]
        %v871 = vld [vmem:[%s6 + $0x2b0] sm:$0xf]
        %v872 = vld [vmem:[%s6 + $0x2b4] sm:$0xf]
        %v873 = vld [vmem:[%s6 + $0x2b8] sm:$0xf]
        %v874 = vld [vmem:[%s6 + $0x2bc] sm:$0xf]
        %v875 = vld [vmem:[%s6 + $0x2c0] sm:$0xf]
        %v876 = vld [vmem:[%s6 + $0x2c4] sm:$0xf]
        %v877 = vld [vmem:[%s6 + $0x2c8] sm:$0xf]
        %v878 = vld [vmem:[%s6 + $0x2cc] sm:$0xf]
        %v879 = vld [vmem:[%s6 + $0x2d0] sm:$0xf]
        %v880 = vld [vmem:[%s6 + $0x2d4] sm:$0xf]
        %v881 = vld [vmem:[%s6 + $0x2d8] sm:$0xf]
        %v882 = vld [vmem:[%s6 + $0x2dc] sm:$0xf]
        %v883 = vld [vmem:[%s6 + $0x2e0] sm:$0xf]
        %v884 = vld [vmem:[%s6 + $0x2e4] sm:$0xf]
        %v885 = vld [vmem:[%s6 + $0x2e8] sm:$0xf]
        %v886 = vld [vmem:[%s6 + $0x2ec] sm:$0xf]
        %v887 = vld [vmem:[%s6 + $0x2f0] sm:$0xf]
        %v888 = vld [vmem:[%s6 + $0x2f4] sm:$0xf]
        %v889 = vld [vmem:[%s6 + $0x2f8] sm:$0xf]
        %v890 = vld [vmem:[%s6 + $0x2fc] sm:$0xf]
        %v891 = vld [vmem:[%s6 + $0x300] sm:$0xf]
        %v892 = vld [vmem:[%s6 + $0x304] sm:$0xf]
        %v893 = vld [vmem:[%s6 + $0x308] sm:$0xf]
        %v894 = vld [vmem:[%s6 + $0x30c] sm:$0xf]
        %v895 = vld [vmem:[%s6 + $0x310] sm:$0xf]
        %v896 = vld [vmem:[%s6 + $0x314] sm:$0xf]
        %v897 = vld [vmem:[%s6 + $0x318] sm:$0xf]
        %v898 = vld [vmem:[%s6 + $0x31c] sm:$0xf]
        %v899 = vld [vmem:[%s6 + $0x320] sm:$0xf]
        %v900 = vld [vmem:[%s6 + $0x324] sm:$0xf]
        %v901 = vld [vmem:[%s6 + $0x328] sm:$0xf]
        %v902 = vld [vmem:[%s6 + $0x32c] sm:$0xf]
        %v903 = vld [vmem:[%s6 + $0x330] sm:$0xf]
        %v904 = vld [vmem:[%s6 + $0x334] sm:$0xf]
        %v905 = vld [vmem:[%s6 + $0x338] sm:$0xf]
        %v906 = vld [vmem:[%s6 + $0x33c] sm:$0xf]
        %v907 = vld [vmem:[%s6 + $0x340] sm:$0xf]
        %v908 = vld [vmem:[%s6 + $0x344] sm:$0xf]
        %v909 = vld [vmem:[%s6 + $0x348] sm:$0xf]
        %v910 = vld [vmem:[%s6 + $0x34c] sm:$0xf]
        %v911 = vld [vmem:[%s6 + $0x350] sm:$0xf]
        %v912 = vld [vmem:[%s6 + $0x354] sm:$0xf]
        %v913 = vld [vmem:[%s6 + $0x358] sm:$0xf]
        %v914 = vld [vmem:[%s6 + $0x35c] sm:$0xf]
        %v915 = vld [vmem:[%s6 + $0x360] sm:$0xf]
        %v916 = vld [vmem:[%s6 + $0x364] sm:$0xf]
        %v917 = vld [vmem:[%s6 + $0x368] sm:$0xf]
        %v918 = vld [vmem:[%s6 + $0x36c] sm:$0xf]
        %v919 = vld [vmem:[%s6 + $0x370] sm:$0xf]
        %v920 = vld [vmem:[%s6 + $0x374] sm:$0xf]
        %v921 = vld [vmem:[%s6 + $0x378] sm:$0xf]
        %v922 = vld [vmem:[%s6 + $0x37c] sm:$0xf]
        %v923 = vld [vmem:[%s6 + $0x380] sm:$0xf]
        %v924 = vld [vmem:[%s6 + $0x384] sm:$0xf]
        %v925 = vld [vmem:[%s6 + $0x388] sm:$0xf]
        %v926 = vld [vmem:[%s6 + $0x38c] sm:$0xf]
        %v927 = vld [vmem:[%s6 + $0x390] sm:$0xf]
        %v928 = vld [vmem:[%s6 + $0x394] sm:$0xf]
        %v929 = vld [vmem:[%s6 + $0x398] sm:$0xf]
        %v930 = vld [vmem:[%s6 + $0x39c] sm:$0xf]
        %v931 = vld [vmem:[%s6 + $0x3a0] sm:$0xf]
        %v932 = vld [vmem:[%s6 + $0x3a4] sm:$0xf]
        %v933 = vld [vmem:[%s6 + $0x3a8] sm:$0xf]
        %v934 = vld [vmem:[%s6 + $0x3ac] sm:$0xf]
        %v935 = vld [vmem:[%s6 + $0x3b0] sm:$0xf]
        %v936 = vld [vmem:[%s6 + $0x3b4] sm:$0xf]
        %v937 = vld [vmem:[%s6 + $0x3b8] sm:$0xf]
        %v938 = vld [vmem:[%s6 + $0x3bc] sm:$0xf]
        %v939 = vld [vmem:[%s6 + $0x3c0] sm:$0xf]
        %v940 = vld [vmem:[%s6 + $0x3c4] sm:$0xf]
        %v941 = vld [vmem:[%s6 + $0x3c8] sm:$0xf]
        %v942 = vld [vmem:[%s6 + $0x3cc] sm:$0xf]
        %v943 = vld [vmem:[%s6 + $0x3d0] sm:$0xf]
        %v944 = vld [vmem:[%s6 + $0x3d4] sm:$0xf]
        %v945 = vld [vmem:[%s6 + $0x3d8] sm:$0xf]
        %v946 = vld [vmem:[%s6 + $0x3dc] sm:$0xf]
        %v947 = vld [vmem:[%s6 + $0x3e0] sm:$0xf]
        %v948 = vld [vmem:[%s6 + $0x3e4] sm:$0xf]
        %v949 = vld [vmem:[%s6 + $0x3e8] sm:$0xf]
        %v950 = vld [vmem:[%s6 + $0x3ec] sm:$0xf]
        %v951 = vld [vmem:[%s6 + $0x3f0] sm:$0xf]
        %v952 = vld [vmem:[%s6 + $0x3f4] sm:$0xf]
        %v953 = vld [vmem:[%s6 + $0x3f8] sm:$0xf]
        %v954 = vld [vmem:[%s6 + $0x3fc] sm:$0xf]
        %v1211 = vunpack.c.l.b16 %v699
        %v1212 = vunpack.c.l.b16 %v700
        %v1213 = vunpack.c.l.b16 %v701
        %v1214 = vunpack.c.l.b16 %v702
        %v1215 = vunpack.c.l.b16 %v703
        %v1216 = vunpack.c.l.b16 %v704
        %v1217 = vunpack.c.l.b16 %v705
        %v1218 = vunpack.c.l.b16 %v706
        %v1219 = vunpack.c.l.b16 %v707
        %v1220 = vunpack.c.l.b16 %v708
        %v1221 = vunpack.c.l.b16 %v709
        %v1222 = vunpack.c.l.b16 %v710
        %v1223 = vunpack.c.l.b16 %v711
        %v1224 = vunpack.c.l.b16 %v712
        %v1225 = vunpack.c.l.b16 %v713
        %v1226 = vunpack.c.l.b16 %v714
        %v1227 = vunpack.c.l.b16 %v715
        %v1228 = vunpack.c.l.b16 %v716
        %v1229 = vunpack.c.l.b16 %v717
        %v1230 = vunpack.c.l.b16 %v718
        %v1231 = vunpack.c.l.b16 %v719
        %v1232 = vunpack.c.l.b16 %v720
        %v1233 = vunpack.c.l.b16 %v721
        %v1234 = vunpack.c.l.b16 %v722
        %v1235 = vunpack.c.l.b16 %v723
        %v1236 = vunpack.c.l.b16 %v724
        %v1237 = vunpack.c.l.b16 %v725
        %v1238 = vunpack.c.l.b16 %v726
        %v1239 = vunpack.c.l.b16 %v727
        %v1240 = vunpack.c.l.b16 %v728
        %v1241 = vunpack.c.l.b16 %v729
        %v1242 = vunpack.c.l.b16 %v730
        %v1243 = vunpack.c.l.b16 %v731
        %v1244 = vunpack.c.l.b16 %v732
        %v1245 = vunpack.c.l.b16 %v733
        %v1246 = vunpack.c.l.b16 %v734
        %v1247 = vunpack.c.l.b16 %v735
        %v1248 = vunpack.c.l.b16 %v736
        %v1249 = vunpack.c.l.b16 %v737
        %v1250 = vunpack.c.l.b16 %v738
        %v1251 = vunpack.c.l.b16 %v739
        %v1252 = vunpack.c.l.b16 %v740
        %v1253 = vunpack.c.l.b16 %v741
        %v1254 = vunpack.c.l.b16 %v742
        %v1255 = vunpack.c.l.b16 %v743
        %v1256 = vunpack.c.l.b16 %v744
        %v1257 = vunpack.c.l.b16 %v745
        %v1258 = vunpack.c.l.b16 %v746
        %v1259 = vunpack.c.l.b16 %v747
        %v1260 = vunpack.c.l.b16 %v748
        %v1261 = vunpack.c.l.b16 %v749
        %v1262 = vunpack.c.l.b16 %v750
        %v1263 = vunpack.c.l.b16 %v751
        %v1264 = vunpack.c.l.b16 %v752
        %v1265 = vunpack.c.l.b16 %v753
        %v1266 = vunpack.c.l.b16 %v754
        %v1267 = vunpack.c.l.b16 %v755
        %v1268 = vunpack.c.l.b16 %v756
        %v1269 = vunpack.c.l.b16 %v757
        %v1270 = vunpack.c.l.b16 %v758
        %v1271 = vunpack.c.l.b16 %v759
        %v1272 = vunpack.c.l.b16 %v760
        %v1273 = vunpack.c.l.b16 %v761
        %v1274 = vunpack.c.l.b16 %v762
        %v1275 = vunpack.c.l.b16 %v763
        %v1276 = vunpack.c.l.b16 %v764
        %v1277 = vunpack.c.l.b16 %v765
        %v1278 = vunpack.c.l.b16 %v766
        %v1279 = vunpack.c.l.b16 %v767
        %v1280 = vunpack.c.l.b16 %v768
        %v1281 = vunpack.c.l.b16 %v769
        %v1282 = vunpack.c.l.b16 %v770
        %v1283 = vunpack.c.l.b16 %v771
        %v1284 = vunpack.c.l.b16 %v772
        %v1285 = vunpack.c.l.b16 %v773
        %v1286 = vunpack.c.l.b16 %v774
        %v1287 = vunpack.c.l.b16 %v775
        %v1288 = vunpack.c.l.b16 %v776
        %v1289 = vunpack.c.l.b16 %v777
        %v1290 = vunpack.c.l.b16 %v778
        %v1291 = vunpack.c.l.b16 %v779
        %v1292 = vunpack.c.l.b16 %v780
        %v1293 = vunpack.c.l.b16 %v781
        %v1294 = vunpack.c.l.b16 %v782
        %v1295 = vunpack.c.l.b16 %v783
        %v1296 = vunpack.c.l.b16 %v784
        %v1297 = vunpack.c.l.b16 %v785
        %v1298 = vunpack.c.l.b16 %v786
        %v1299 = vunpack.c.l.b16 %v787
        %v1300 = vunpack.c.l.b16 %v788
        %v1301 = vunpack.c.l.b16 %v789
        %v1302 = vunpack.c.l.b16 %v790
        %v1303 = vunpack.c.l.b16 %v791
        %v1304 = vunpack.c.l.b16 %v792
        %v1305 = vunpack.c.l.b16 %v793
        %v1306 = vunpack.c.l.b16 %v794
        %v1307 = vunpack.c.l.b16 %v795
        %v1308 = vunpack.c.l.b16 %v796
        %v1309 = vunpack.c.l.b16 %v797
        %v1310 = vunpack.c.l.b16 %v798
        %v1311 = vunpack.c.l.b16 %v799
        %v1312 = vunpack.c.l.b16 %v800
        %v1313 = vunpack.c.l.b16 %v801
        %v1314 = vunpack.c.l.b16 %v802
        %v1315 = vunpack.c.l.b16 %v803
        %v1316 = vunpack.c.l.b16 %v804
        %v1317 = vunpack.c.l.b16 %v805
        %v1318 = vunpack.c.l.b16 %v806
        %v1319 = vunpack.c.l.b16 %v807
        %v1320 = vunpack.c.l.b16 %v808
        %v1321 = vunpack.c.l.b16 %v809
        %v1322 = vunpack.c.l.b16 %v810
        %v1323 = vunpack.c.l.b16 %v811
        %v1324 = vunpack.c.l.b16 %v812
        %v1325 = vunpack.c.l.b16 %v813
        %v1326 = vunpack.c.l.b16 %v814
        %v1327 = vunpack.c.l.b16 %v815
        %v1328 = vunpack.c.l.b16 %v816
        %v1329 = vunpack.c.l.b16 %v817
        %v1330 = vunpack.c.l.b16 %v818
        %v1331 = vunpack.c.l.b16 %v819
        %v1332 = vunpack.c.l.b16 %v820
        %v1333 = vunpack.c.l.b16 %v821
        %v1334 = vunpack.c.l.b16 %v822
        %v1335 = vunpack.c.l.b16 %v823
        %v1336 = vunpack.c.l.b16 %v824
        %v1337 = vunpack.c.l.b16 %v825
        %v1338 = vunpack.c.l.b16 %v826
        %v1339 = vunpack.c.l.b16 %v827
        %v1340 = vunpack.c.l.b16 %v828
        %v1341 = vunpack.c.l.b16 %v829
        %v1342 = vunpack.c.l.b16 %v830
        %v1343 = vunpack.c.l.b16 %v831
        %v1344 = vunpack.c.l.b16 %v832
        %v1345 = vunpack.c.l.b16 %v833
        %v1346 = vunpack.c.l.b16 %v834
        %v1347 = vunpack.c.l.b16 %v835
        %v1348 = vunpack.c.l.b16 %v836
        %v1349 = vunpack.c.l.b16 %v837
        %v1350 = vunpack.c.l.b16 %v838
        %v1351 = vunpack.c.l.b16 %v839
        %v1352 = vunpack.c.l.b16 %v840
        %v1353 = vunpack.c.l.b16 %v841
        %v1354 = vunpack.c.l.b16 %v842
        %v1355 = vunpack.c.l.b16 %v843
        %v1356 = vunpack.c.l.b16 %v844
        %v1357 = vunpack.c.l.b16 %v845
        %v1358 = vunpack.c.l.b16 %v846
        %v1359 = vunpack.c.l.b16 %v847
        %v1360 = vunpack.c.l.b16 %v848
        %v1361 = vunpack.c.l.b16 %v849
        %v1362 = vunpack.c.l.b16 %v850
        %v1363 = vunpack.c.l.b16 %v851
        %v1364 = vunpack.c.l.b16 %v852
        %v1365 = vunpack.c.l.b16 %v853
        %v1366 = vunpack.c.l.b16 %v854
        %v1367 = vunpack.c.l.b16 %v855
        %v1368 = vunpack.c.l.b16 %v856
        %v1369 = vunpack.c.l.b16 %v857
        %v1370 = vunpack.c.l.b16 %v858
        %v1371 = vunpack.c.l.b16 %v859
        %v1372 = vunpack.c.l.b16 %v860
        %v1373 = vunpack.c.l.b16 %v861
        %v1374 = vunpack.c.l.b16 %v862
        %v1375 = vunpack.c.l.b16 %v863
        %v1376 = vunpack.c.l.b16 %v864
        %v1377 = vunpack.c.l.b16 %v865
        %v1378 = vunpack.c.l.b16 %v866
        %v1379 = vunpack.c.l.b16 %v867
        %v1380 = vunpack.c.l.b16 %v868
        %v1381 = vunpack.c.l.b16 %v869
        %v1382 = vunpack.c.l.b16 %v870
        %v1383 = vunpack.c.l.b16 %v871
        %v1384 = vunpack.c.l.b16 %v872
        %v1385 = vunpack.c.l.b16 %v873
        %v1386 = vunpack.c.l.b16 %v874
        %v1387 = vunpack.c.l.b16 %v875
        %v1388 = vunpack.c.l.b16 %v876
        %v1389 = vunpack.c.l.b16 %v877
        %v1390 = vunpack.c.l.b16 %v878
        %v1391 = vunpack.c.l.b16 %v879
        %v1392 = vunpack.c.l.b16 %v880
        %v1393 = vunpack.c.l.b16 %v881
        %v1394 = vunpack.c.l.b16 %v882
        %v1395 = vunpack.c.l.b16 %v883
        %v1396 = vunpack.c.l.b16 %v884
        %v1397 = vunpack.c.l.b16 %v885
        %v1398 = vunpack.c.l.b16 %v886
        %v1399 = vunpack.c.l.b16 %v887
        %v1400 = vunpack.c.l.b16 %v888
        %v1401 = vunpack.c.l.b16 %v889
        %v1402 = vunpack.c.l.b16 %v890
        %v1403 = vunpack.c.l.b16 %v891
        %v1404 = vunpack.c.l.b16 %v892
        %v1405 = vunpack.c.l.b16 %v893
        %v1406 = vunpack.c.l.b16 %v894
        %v1407 = vunpack.c.l.b16 %v895
        %v1408 = vunpack.c.l.b16 %v896
        %v1409 = vunpack.c.l.b16 %v897
        %v1410 = vunpack.c.l.b16 %v898
        %v1411 = vunpack.c.l.b16 %v899
        %v1412 = vunpack.c.l.b16 %v900
        %v1413 = vunpack.c.l.b16 %v901
        %v1414 = vunpack.c.l.b16 %v902
        %v1415 = vunpack.c.l.b16 %v903
        %v1416 = vunpack.c.l.b16 %v904
        %v1417 = vunpack.c.l.b16 %v905
        %v1418 = vunpack.c.l.b16 %v906
        %v1419 = vunpack.c.l.b16 %v907
        %v1420 = vunpack.c.l.b16 %v908
        %v1421 = vunpack.c.l.b16 %v909
        %v1422 = vunpack.c.l.b16 %v910
        %v1423 = vunpack.c.l.b16 %v911
        %v1424 = vunpack.c.l.b16 %v912
        %v1425 = vunpack.c.l.b16 %v913
        %v1426 = vunpack.c.l.b16 %v914
        %v1427 = vunpack.c.l.b16 %v915
        %v1428 = vunpack.c.l.b16 %v916
        %v1429 = vunpack.c.l.b16 %v917
        %v1430 = vunpack.c.l.b16 %v918
        %v1431 = vunpack.c.l.b16 %v919
        %v1432 = vunpack.c.l.b16 %v920
        %v1433 = vunpack.c.l.b16 %v921
        %v1434 = vunpack.c.l.b16 %v922
        %v1435 = vunpack.c.l.b16 %v923
        %v1436 = vunpack.c.l.b16 %v924
        %v1437 = vunpack.c.l.b16 %v925
        %v1438 = vunpack.c.l.b16 %v926
        %v1439 = vunpack.c.l.b16 %v927
        %v1440 = vunpack.c.l.b16 %v928
        %v1441 = vunpack.c.l.b16 %v929
        %v1442 = vunpack.c.l.b16 %v930
        %v1443 = vunpack.c.l.b16 %v931
        %v1444 = vunpack.c.l.b16 %v932
        %v1445 = vunpack.c.l.b16 %v933
        %v1446 = vunpack.c.l.b16 %v934
        %v1447 = vunpack.c.l.b16 %v935
        %v1448 = vunpack.c.l.b16 %v936
        %v1449 = vunpack.c.l.b16 %v937
        %v1450 = vunpack.c.l.b16 %v938
        %v1451 = vunpack.c.l.b16 %v939
        %v1452 = vunpack.c.l.b16 %v940
        %v1453 = vunpack.c.l.b16 %v941
        %v1454 = vunpack.c.l.b16 %v942
        %v1455 = vunpack.c.l.b16 %v943
        %v1456 = vunpack.c.l.b16 %v944
        %v1457 = vunpack.c.l.b16 %v945
        %v1458 = vunpack.c.l.b16 %v946
        %v1459 = vunpack.c.l.b16 %v947
        %v1460 = vunpack.c.l.b16 %v948
        %v1461 = vunpack.c.l.b16 %v949
        %v1462 = vunpack.c.l.b16 %v950
        %v1463 = vunpack.c.l.b16 %v951
        %v1464 = vunpack.c.l.b16 %v952
        %v1465 = vunpack.c.l.b16 %v953
        %v1466 = vunpack.c.l.b16 %v954
        %v1467 = vpack.c.b16 %v1212, %v1211
        %v1468 = vpack.c.b16 %v1214, %v1213
        %v1469 = vpack.c.b16 %v1216, %v1215
        %v1470 = vpack.c.b16 %v1218, %v1217
        %v1471 = vpack.c.b16 %v1220, %v1219
        %v1472 = vpack.c.b16 %v1222, %v1221
        %v1473 = vpack.c.b16 %v1224, %v1223
        %v1474 = vpack.c.b16 %v1226, %v1225
        %v1475 = vpack.c.b16 %v1228, %v1227
        %v1476 = vpack.c.b16 %v1230, %v1229
        %v1477 = vpack.c.b16 %v1232, %v1231
        %v1478 = vpack.c.b16 %v1234, %v1233
        %v1479 = vpack.c.b16 %v1236, %v1235
        %v1480 = vpack.c.b16 %v1238, %v1237
        %v1481 = vpack.c.b16 %v1240, %v1239
        %v1482 = vpack.c.b16 %v1242, %v1241
        %v1483 = vpack.c.b16 %v1244, %v1243
        %v1484 = vpack.c.b16 %v1246, %v1245
        %v1485 = vpack.c.b16 %v1248, %v1247
        %v1486 = vpack.c.b16 %v1250, %v1249
        %v1487 = vpack.c.b16 %v1252, %v1251
        %v1488 = vpack.c.b16 %v1254, %v1253
        %v1489 = vpack.c.b16 %v1256, %v1255
        %v1490 = vpack.c.b16 %v1258, %v1257
        %v1491 = vpack.c.b16 %v1260, %v1259
        %v1492 = vpack.c.b16 %v1262, %v1261
        %v1493 = vpack.c.b16 %v1264, %v1263
        %v1494 = vpack.c.b16 %v1266, %v1265
        %v1495 = vpack.c.b16 %v1268, %v1267
        %v1496 = vpack.c.b16 %v1270, %v1269
        %v1497 = vpack.c.b16 %v1272, %v1271
        %v1498 = vpack.c.b16 %v1274, %v1273
        %v1499 = vpack.c.b16 %v1276, %v1275
        %v1500 = vpack.c.b16 %v1278, %v1277
        %v1501 = vpack.c.b16 %v1280, %v1279
        %v1502 = vpack.c.b16 %v1282, %v1281
        %v1503 = vpack.c.b16 %v1284, %v1283
        %v1504 = vpack.c.b16 %v1286, %v1285
        %v1505 = vpack.c.b16 %v1288, %v1287
        %v1506 = vpack.c.b16 %v1290, %v1289
        %v1507 = vpack.c.b16 %v1292, %v1291
        %v1508 = vpack.c.b16 %v1294, %v1293
        %v1509 = vpack.c.b16 %v1296, %v1295
        %v1510 = vpack.c.b16 %v1298, %v1297
        %v1511 = vpack.c.b16 %v1300, %v1299
        %v1512 = vpack.c.b16 %v1302, %v1301
        %v1513 = vpack.c.b16 %v1304, %v1303
        %v1514 = vpack.c.b16 %v1306, %v1305
        %v1515 = vpack.c.b16 %v1308, %v1307
        %v1516 = vpack.c.b16 %v1310, %v1309
        %v1517 = vpack.c.b16 %v1312, %v1311
        %v1518 = vpack.c.b16 %v1314, %v1313
        %v1519 = vpack.c.b16 %v1316, %v1315
        %v1520 = vpack.c.b16 %v1318, %v1317
        %v1521 = vpack.c.b16 %v1320, %v1319
        %v1522 = vpack.c.b16 %v1322, %v1321
        %v1523 = vpack.c.b16 %v1324, %v1323
        %v1524 = vpack.c.b16 %v1326, %v1325
        %v1525 = vpack.c.b16 %v1328, %v1327
        %v1526 = vpack.c.b16 %v1330, %v1329
        %v1527 = vpack.c.b16 %v1332, %v1331
        %v1528 = vpack.c.b16 %v1334, %v1333
        %v1529 = vpack.c.b16 %v1336, %v1335
        %v1530 = vpack.c.b16 %v1338, %v1337
        %v1531 = vpack.c.b16 %v1340, %v1339
        %v1532 = vpack.c.b16 %v1342, %v1341
        %v1533 = vpack.c.b16 %v1344, %v1343
        %v1534 = vpack.c.b16 %v1346, %v1345
        %v1535 = vpack.c.b16 %v1348, %v1347
        %v1536 = vpack.c.b16 %v1350, %v1349
        %v1537 = vpack.c.b16 %v1352, %v1351
        %v1538 = vpack.c.b16 %v1354, %v1353
        %v1539 = vpack.c.b16 %v1356, %v1355
        %v1540 = vpack.c.b16 %v1358, %v1357
        %v1541 = vpack.c.b16 %v1360, %v1359
        %v1542 = vpack.c.b16 %v1362, %v1361
        %v1543 = vpack.c.b16 %v1364, %v1363
        %v1544 = vpack.c.b16 %v1366, %v1365
        %v1545 = vpack.c.b16 %v1368, %v1367
        %v1546 = vpack.c.b16 %v1370, %v1369
        %v1547 = vpack.c.b16 %v1372, %v1371
        %v1548 = vpack.c.b16 %v1374, %v1373
        %v1549 = vpack.c.b16 %v1376, %v1375
        %v1550 = vpack.c.b16 %v1378, %v1377
        %v1551 = vpack.c.b16 %v1380, %v1379
        %v1552 = vpack.c.b16 %v1382, %v1381
        %v1553 = vpack.c.b16 %v1384, %v1383
        %v1554 = vpack.c.b16 %v1386, %v1385
        %v1555 = vpack.c.b16 %v1388, %v1387
        %v1556 = vpack.c.b16 %v1390, %v1389
        %v1557 = vpack.c.b16 %v1392, %v1391
        %v1558 = vpack.c.b16 %v1394, %v1393
        %v1559 = vpack.c.b16 %v1396, %v1395
        %v1560 = vpack.c.b16 %v1398, %v1397
        %v1561 = vpack.c.b16 %v1400, %v1399
        %v1562 = vpack.c.b16 %v1402, %v1401
        %v1563 = vpack.c.b16 %v1404, %v1403
        %v1564 = vpack.c.b16 %v1406, %v1405
        %v1565 = vpack.c.b16 %v1408, %v1407
        %v1566 = vpack.c.b16 %v1410, %v1409
        %v1567 = vpack.c.b16 %v1412, %v1411
        %v1568 = vpack.c.b16 %v1414, %v1413
        %v1569 = vpack.c.b16 %v1416, %v1415
        %v1570 = vpack.c.b16 %v1418, %v1417
        %v1571 = vpack.c.b16 %v1420, %v1419
        %v1572 = vpack.c.b16 %v1422, %v1421
        %v1573 = vpack.c.b16 %v1424, %v1423
        %v1574 = vpack.c.b16 %v1426, %v1425
        %v1575 = vpack.c.b16 %v1428, %v1427
        %v1576 = vpack.c.b16 %v1430, %v1429
        %v1577 = vpack.c.b16 %v1432, %v1431
        %v1578 = vpack.c.b16 %v1434, %v1433
        %v1579 = vpack.c.b16 %v1436, %v1435
        %v1580 = vpack.c.b16 %v1438, %v1437
        %v1581 = vpack.c.b16 %v1440, %v1439
        %v1582 = vpack.c.b16 %v1442, %v1441
        %v1583 = vpack.c.b16 %v1444, %v1443
        %v1584 = vpack.c.b16 %v1446, %v1445
        %v1585 = vpack.c.b16 %v1448, %v1447
        %v1586 = vpack.c.b16 %v1450, %v1449
        %v1587 = vpack.c.b16 %v1452, %v1451
        %v1588 = vpack.c.b16 %v1454, %v1453
        %v1589 = vpack.c.b16 %v1456, %v1455
        %v1590 = vpack.c.b16 %v1458, %v1457
        %v1591 = vpack.c.b16 %v1460, %v1459
        %v1592 = vpack.c.b16 %v1462, %v1461
        %v1593 = vpack.c.b16 %v1464, %v1463
        %v1594 = vpack.c.b16 %v1466, %v1465
        %1723 = vmatpush.bf16.msra.mxu0 %v1474
        %1724 = vmatpush.bf16.msra.mxu0 %v1473
        %1725 = vmatpush.bf16.msra.mxu0 %v1472
        %1726 = vmatpush.bf16.msra.mxu0 %v1471
        %1727 = vmatpush.bf16.msra.mxu0 %v1470
        %1728 = vmatpush.bf16.msra.mxu0 %v1469
        %1729 = vmatpush.bf16.msra.mxu0 %v1468
        %1730 = vmatpush.bf16.msra.mxu0 %v1467
        %1731 = vmatmul.bf16.gmra.mxu0 %v683
        %v1732 = vpop.f32.mrf.mxu0
        %v1733 = vadd.f32 0.0, %v1732
        %v1734 = vpop.f32.mrf.mxu0
        %v1735 = vadd.f32 0.0, %v1734
        %1736 = vdwg.mxu0
        %1737 = vmatpush.bf16.msra.mxu0 %v1482
        %1738 = vmatpush.bf16.msra.mxu0 %v1481
        %1739 = vmatpush.bf16.msra.mxu0 %v1480
        %1740 = vmatpush.bf16.msra.mxu0 %v1479
        %1741 = vmatpush.bf16.msra.mxu0 %v1478
        %1742 = vmatpush.bf16.msra.mxu0 %v1477
        %1743 = vmatpush.bf16.msra.mxu0 %v1476
        %1744 = vmatpush.bf16.msra.mxu0 %v1475
        %1745 = vmatmul.bf16.gmra.mxu0 %v684
        %v1746 = vpop.f32.mrf.mxu0
        %v1747 = vadd.f32 %v1733, %v1746
        %v1748 = vpop.f32.mrf.mxu0
        %v1749 = vadd.f32 %v1735, %v1748
        %1750 = vdwg.mxu0
        %1751 = vmatpush.bf16.msra.mxu0 %v1490
        %1752 = vmatpush.bf16.msra.mxu0 %v1489
        %1753 = vmatpush.bf16.msra.mxu0 %v1488
        %1754 = vmatpush.bf16.msra.mxu0 %v1487
        %1755 = vmatpush.bf16.msra.mxu0 %v1486
        %1756 = vmatpush.bf16.msra.mxu0 %v1485
        %1757 = vmatpush.bf16.msra.mxu0 %v1484
        %1758 = vmatpush.bf16.msra.mxu0 %v1483
        %1759 = vmatmul.bf16.gmra.mxu0 %v685
        %v1760 = vpop.f32.mrf.mxu0
        %v1761 = vadd.f32 %v1747, %v1760
        %v1762 = vpop.f32.mrf.mxu0
        %v1763 = vadd.f32 %v1749, %v1762
        %1764 = vdwg.mxu0
        %1765 = vmatpush.bf16.msra.mxu0 %v1498
        %1766 = vmatpush.bf16.msra.mxu0 %v1497
        %1767 = vmatpush.bf16.msra.mxu0 %v1496
        %1768 = vmatpush.bf16.msra.mxu0 %v1495
        %1769 = vmatpush.bf16.msra.mxu0 %v1494
        %1770 = vmatpush.bf16.msra.mxu0 %v1493
        %1771 = vmatpush.bf16.msra.mxu0 %v1492
        %1772 = vmatpush.bf16.msra.mxu0 %v1491
        %1773 = vmatmul.bf16.gmra.mxu0 %v686
        %v1774 = vpop.f32.mrf.mxu0
        %v1775 = vadd.f32 %v1761, %v1774
        %v1776 = vpop.f32.mrf.mxu0
        %v1777 = vadd.f32 %v1763, %v1776
        %1778 = vdwg.mxu0
        %1779 = vmatpush.bf16.msra.mxu0 %v1506
        %1780 = vmatpush.bf16.msra.mxu0 %v1505
        %1781 = vmatpush.bf16.msra.mxu0 %v1504
        %1782 = vmatpush.bf16.msra.mxu0 %v1503
        %1783 = vmatpush.bf16.msra.mxu0 %v1502
        %1784 = vmatpush.bf16.msra.mxu0 %v1501
        %1785 = vmatpush.bf16.msra.mxu0 %v1500
        %1786 = vmatpush.bf16.msra.mxu0 %v1499
        %1787 = vmatmul.bf16.gmra.mxu0 %v687
        %v1788 = vpop.f32.mrf.mxu0
        %v1789 = vadd.f32 %v1775, %v1788
        %v1790 = vpop.f32.mrf.mxu0
        %v1791 = vadd.f32 %v1777, %v1790
        %1792 = vdwg.mxu0
        %1793 = vmatpush.bf16.msra.mxu0 %v1514
        %1794 = vmatpush.bf16.msra.mxu0 %v1513
        %1795 = vmatpush.bf16.msra.mxu0 %v1512
        %1796 = vmatpush.bf16.msra.mxu0 %v1511
        %1797 = vmatpush.bf16.msra.mxu0 %v1510
        %1798 = vmatpush.bf16.msra.mxu0 %v1509
        %1799 = vmatpush.bf16.msra.mxu0 %v1508
        %1800 = vmatpush.bf16.msra.mxu0 %v1507
        %1801 = vmatmul.bf16.gmra.mxu0 %v688
        %v1802 = vpop.f32.mrf.mxu0
        %v1803 = vadd.f32 %v1789, %v1802
        %v1804 = vpop.f32.mrf.mxu0
        %v1805 = vadd.f32 %v1791, %v1804
        %1806 = vdwg.mxu0
        %1807 = vmatpush.bf16.msra.mxu0 %v1522
        %1808 = vmatpush.bf16.msra.mxu0 %v1521
        %1809 = vmatpush.bf16.msra.mxu0 %v1520
        %1810 = vmatpush.bf16.msra.mxu0 %v1519
        %1811 = vmatpush.bf16.msra.mxu0 %v1518
        %1812 = vmatpush.bf16.msra.mxu0 %v1517
        %1813 = vmatpush.bf16.msra.mxu0 %v1516
        %1814 = vmatpush.bf16.msra.mxu0 %v1515
        %1815 = vmatmul.bf16.gmra.mxu0 %v689
        %v1816 = vpop.f32.mrf.mxu0
        %v1817 = vadd.f32 %v1803, %v1816
        %v1818 = vpop.f32.mrf.mxu0
        %v1819 = vadd.f32 %v1805, %v1818
        %1820 = vdwg.mxu0
        %1821 = vmatpush.bf16.msra.mxu0 %v1530
        %1822 = vmatpush.bf16.msra.mxu0 %v1529
        %1823 = vmatpush.bf16.msra.mxu0 %v1528
        %1824 = vmatpush.bf16.msra.mxu0 %v1527
        %1825 = vmatpush.bf16.msra.mxu0 %v1526
        %1826 = vmatpush.bf16.msra.mxu0 %v1525
        %1827 = vmatpush.bf16.msra.mxu0 %v1524
        %1828 = vmatpush.bf16.msra.mxu0 %v1523
        %1829 = vmatmul.bf16.gmra.mxu0 %v690
        %v1830 = vpop.f32.mrf.mxu0
        %v1831 = vadd.f32 %v1817, %v1830
        %v1832 = vpop.f32.mrf.mxu0
        %v1833 = vadd.f32 %v1819, %v1832
        %1834 = vdwg.mxu0
        %1835 = vmatpush.bf16.msra.mxu0 %v1538
        %1836 = vmatpush.bf16.msra.mxu0 %v1537
        %1837 = vmatpush.bf16.msra.mxu0 %v1536
        %1838 = vmatpush.bf16.msra.mxu0 %v1535
        %1839 = vmatpush.bf16.msra.mxu0 %v1534
        %1840 = vmatpush.bf16.msra.mxu0 %v1533
        %1841 = vmatpush.bf16.msra.mxu0 %v1532
        %1842 = vmatpush.bf16.msra.mxu0 %v1531
        %1843 = vmatmul.bf16.gmra.mxu0 %v691
        %v1844 = vpop.f32.mrf.mxu0
        %v1845 = vadd.f32 %v1831, %v1844
        %v1846 = vpop.f32.mrf.mxu0
        %v1847 = vadd.f32 %v1833, %v1846
        %1848 = vdwg.mxu0
        %1849 = vmatpush.bf16.msra.mxu0 %v1546
        %1850 = vmatpush.bf16.msra.mxu0 %v1545
        %1851 = vmatpush.bf16.msra.mxu0 %v1544
        %1852 = vmatpush.bf16.msra.mxu0 %v1543
        %1853 = vmatpush.bf16.msra.mxu0 %v1542
        %1854 = vmatpush.bf16.msra.mxu0 %v1541
        %1855 = vmatpush.bf16.msra.mxu0 %v1540
        %1856 = vmatpush.bf16.msra.mxu0 %v1539
        %1857 = vmatmul.bf16.gmra.mxu0 %v692
        %v1858 = vpop.f32.mrf.mxu0
        %v1859 = vadd.f32 %v1845, %v1858
        %v1860 = vpop.f32.mrf.mxu0
        %v1861 = vadd.f32 %v1847, %v1860
        %1862 = vdwg.mxu0
        %1863 = vmatpush.bf16.msra.mxu0 %v1554
        %1864 = vmatpush.bf16.msra.mxu0 %v1553
        %1865 = vmatpush.bf16.msra.mxu0 %v1552
        %1866 = vmatpush.bf16.msra.mxu0 %v1551
        %1867 = vmatpush.bf16.msra.mxu0 %v1550
        %1868 = vmatpush.bf16.msra.mxu0 %v1549
        %1869 = vmatpush.bf16.msra.mxu0 %v1548
        %1870 = vmatpush.bf16.msra.mxu0 %v1547
        %1871 = vmatmul.bf16.gmra.mxu0 %v693
        %v1872 = vpop.f32.mrf.mxu0
        %v1873 = vadd.f32 %v1859, %v1872
        %v1874 = vpop.f32.mrf.mxu0
        %v1875 = vadd.f32 %v1861, %v1874
        %1876 = vdwg.mxu0
        %1877 = vmatpush.bf16.msra.mxu0 %v1562
        %1878 = vmatpush.bf16.msra.mxu0 %v1561
        %1879 = vmatpush.bf16.msra.mxu0 %v1560
        %1880 = vmatpush.bf16.msra.mxu0 %v1559
        %1881 = vmatpush.bf16.msra.mxu0 %v1558
        %1882 = vmatpush.bf16.msra.mxu0 %v1557
        %1883 = vmatpush.bf16.msra.mxu0 %v1556
        %1884 = vmatpush.bf16.msra.mxu0 %v1555
        %1885 = vmatmul.bf16.gmra.mxu0 %v694
        %v1886 = vpop.f32.mrf.mxu0
        %v1887 = vadd.f32 %v1873, %v1886
        %v1888 = vpop.f32.mrf.mxu0
        %v1889 = vadd.f32 %v1875, %v1888
        %1890 = vdwg.mxu0
        %1891 = vmatpush.bf16.msra.mxu0 %v1570
        %1892 = vmatpush.bf16.msra.mxu0 %v1569
        %1893 = vmatpush.bf16.msra.mxu0 %v1568
        %1894 = vmatpush.bf16.msra.mxu0 %v1567
        %1895 = vmatpush.bf16.msra.mxu0 %v1566
        %1896 = vmatpush.bf16.msra.mxu0 %v1565
        %1897 = vmatpush.bf16.msra.mxu0 %v1564
        %1898 = vmatpush.bf16.msra.mxu0 %v1563
        %1899 = vmatmul.bf16.gmra.mxu0 %v695
        %v1900 = vpop.f32.mrf.mxu0
        %v1901 = vadd.f32 %v1887, %v1900
        %v1902 = vpop.f32.mrf.mxu0
        %v1903 = vadd.f32 %v1889, %v1902
        %1904 = vdwg.mxu0
        %1905 = vmatpush.bf16.msra.mxu0 %v1578
        %1906 = vmatpush.bf16.msra.mxu0 %v1577
        %1907 = vmatpush.bf16.msra.mxu0 %v1576
        %1908 = vmatpush.bf16.msra.mxu0 %v1575
        %1909 = vmatpush.bf16.msra.mxu0 %v1574
        %1910 = vmatpush.bf16.msra.mxu0 %v1573
        %1911 = vmatpush.bf16.msra.mxu0 %v1572
        %1912 = vmatpush.bf16.msra.mxu0 %v1571
        %1913 = vmatmul.bf16.gmra.mxu0 %v696
        %v1914 = vpop.f32.mrf.mxu0
        %v1915 = vadd.f32 %v1901, %v1914
        %v1916 = vpop.f32.mrf.mxu0
        %v1917 = vadd.f32 %v1903, %v1916
        %1918 = vdwg.mxu0
        %1919 = vmatpush.bf16.msra.mxu0 %v1586
        %1920 = vmatpush.bf16.msra.mxu0 %v1585
        %1921 = vmatpush.bf16.msra.mxu0 %v1584
        %1922 = vmatpush.bf16.msra.mxu0 %v1583
        %1923 = vmatpush.bf16.msra.mxu0 %v1582
        %1924 = vmatpush.bf16.msra.mxu0 %v1581
        %1925 = vmatpush.bf16.msra.mxu0 %v1580
        %1926 = vmatpush.bf16.msra.mxu0 %v1579
        %1927 = vmatmul.bf16.gmra.mxu0 %v697
        %v1928 = vpop.f32.mrf.mxu0
        %v1929 = vadd.f32 %v1915, %v1928
        %v1930 = vpop.f32.mrf.mxu0
        %v1931 = vadd.f32 %v1917, %v1930
        %1932 = vdwg.mxu0
        %1933 = vmatpush.bf16.msra.mxu0 %v1594
        %1934 = vmatpush.bf16.msra.mxu0 %v1593
        %1935 = vmatpush.bf16.msra.mxu0 %v1592
        %1936 = vmatpush.bf16.msra.mxu0 %v1591
        %1937 = vmatpush.bf16.msra.mxu0 %v1590
        %1938 = vmatpush.bf16.msra.mxu0 %v1589
        %1939 = vmatpush.bf16.msra.mxu0 %v1588
        %1940 = vmatpush.bf16.msra.mxu0 %v1587
        %1941 = vmatmul.bf16.gmra.mxu0 %v698
        %v1942 = vpop.f32.mrf.mxu0
        %v1943 = vadd.f32 %v1929, %v1942
        %v1944 = vpop.f32.mrf.mxu0
        %v1945 = vadd.f32 %v1931, %v1944
        %1946 = vdwg.mxu0
        %v1947 = vmul.f32 %v1943, 0.00390625
        %v1948 = vmul.f32 %v1945, 0.00390625
        %v1949 = vpack.c.bf16 %v1948, %v1947
        %v1950 = vld [vmem:[%s4] sm:$0xf]
        %v1951 = vld [vmem:[%s4 + $0x4] sm:$0xf]
        %v1952 = vld [vmem:[%s5] sm:$0x1]
        %v1954 = vperm.slane %v1952, 0
        %1956 = vxpose.xlu0.c.b16.start [1/8] %v1949, 128
        %1957 = vxpose.xlu0.c.b16.cont [2/8] 0, 128
        %1958 = vxpose.xlu0.c.b16.cont [3/8] 0, 128
        %1959 = vxpose.xlu0.c.b16.cont [4/8] 0, 128
        %1960 = vxpose.xlu0.c.b16.cont [5/8] 0, 128
        %1961 = vxpose.xlu0.c.b16.cont [6/8] 0, 128
        %1962 = vxpose.xlu0.c.b16.cont [7/8] 0, 128
        %1963 = vxpose.xlu0.c.b16.end [8/8] 0, 128
        %v1964 = vpop.trf.xlu0
        %v1965 = vpop.trf.xlu0
        %v1966 = vpop.trf.xlu0
        %v1967 = vpop.trf.xlu0
        %v1968 = vpop.trf.xlu0
        %v1969 = vpop.trf.xlu0
        %v1970 = vpop.trf.xlu0
        %v1971 = vpop.trf.xlu0
        %v1974 = vunpack.c.l.b16 %v1950
        %v1975 = vunpack.c.l.b16 %v1951
        %v1976 = vpack.c.b16 %v1975, %v1974
        %vm1978 = vcmask 130048
        %v1980 = vsel %vm1978, %v1964, 0
        %1982 = vmatpush.bf16.msra.mxu0 0
        %1983 = vmatpush.bf16.msra.mxu0 0
        %1984 = vmatpush.bf16.msra.mxu0 0
        %1985 = vmatpush.bf16.msra.mxu0 0
        %1986 = vmatpush.bf16.msra.mxu0 0
        %1987 = vmatpush.bf16.msra.mxu0 0
        %1988 = vmatpush.bf16.msra.mxu0 0
        %1989 = vmatpush.bf16.msra.mxu0 %v1976
        %1990 = vmatmul.bf16.gmra.mxu0 %v1980
        %v1991 = vpop.f32.mrf.mxu0
        %v1992 = vadd.f32 %v1954, %v1991
        %v1993 = vpop.f32.mrf.mxu0
        %1994 = vdwg.mxu0
        %v1995 = vlaneseq
        %v1996 = vand.u32 %v1995, 127
        %v1997 = vlaneseq
        %v1998 = vshrl.u32 %v1997, 7
        %vm1999 = vcmp.lt.s32.totalorder %v1996, 10
        %v2000 = vsel %vm1999, %v1992, -1e+30
        %2001 = vmax.xlane.f32.xlu0 %v2000
        %v2002 = vpop.xlane.xlu0 %2001
        %v2003 = vsub.f32 %v2000, %v2002
        %v2004 = vmul.f32 %v2003, 1.442695
        %v2005 = vpow.pop %v2004
        %2006 = vadd.xlane.f32.xlu0 %v2005
        %v2007 = vpop.xlane.xlu0 %2006
        %v2008 = vlog2.pop %v2007
        %v2009 = vmul.f32 %v2008, 0.6931472
        %v2010 = vadd.f32 %v2002, %v2009
        %s2011 = smul.u32 %s25, 2
        %s2012 = sadd.s32 %s2011, %s26
        %s2013 = smul.u32 %s2012, 8
        %v2014 = vstv %s2013
        %v2015 = vadd.s32 %v2014, %v1998
        %vm2016 = vcmp.lt.s32.totalorder %v2015, 28
        %v2017 = vld [vmem:[%s323] sm:$0xff]
        %2018 = vset.pattern.permute.xlu0 0
        %2019 = vperm.xlu0 %2018, %v2017
        %v2020 = vpop.permute.xlu0 %2019
        %vm2021 = vcmp.eq.s32.totalorder %v1996, %v2020
        %v2022 = vld [vmem:[#allocation2] sm:$0xff]
        %v2023 = vsel %vm2016, 1, 0
        %vm2024 = vcmp.eq.s32.totalorder %v2023, 1
        %vm2025 = vmand %vm2021, %vm2024
        %v2026 = vsub.f32 %v2010, %v2000
        %v2027 = vsel %vm2025, %v2026, 0.0
        %v2028 = vadd.f32 %v2022, %v2027
        %2029 = vst [vmem:[#allocation2] sm:$0xff] %v2028
        %p2030 = scmp.eq.s32.totalorder %s26, 1
        // Predicated region
        $region53: #{tpu_custom_call.1} parent=47 // pred_check
          %p2031 = pneg %p2030
        $region54: #{tpu_custom_call.1} parent=47 // pred_check_branch
          %2033 = sbr.rel (%p2031) target = $region56
        $region55: #{tpu_custom_call.1} parent=47 // pred_region
          %v2034 = vld [vmem:[#allocation2] sm:$0xff]
          %2035 = vadd.xlane.f32.xlu0 %v2034
          %v2036 = vpop.xlane.xlu0 %2035
          %v2037 = vrot.slane %v2036, 4
          %v2038 = vadd.f32 %v2036, %v2037
          %v2039 = vrot.slane %v2038, 2
          %v2040 = vadd.f32 %v2038, %v2039
          %v2041 = vrot.slane %v2040, 1
          %v2042 = vadd.f32 %v2040, %v2041
          %v2043 = vadd.f32 %v2042, 0.0
          %2044 = vst [vmem:[%s317] sm:$0xff] %v2043
        $region56: #{tpu_custom_call.1} parent=47 // pred_fallthru
          _
        %s2045 = sand.u32 %s206, 1
        %s2046 = scalar_lea.sflag [#allocation4], %s2045
        %s2047 = sand.u32 %s206, 1
        %s2048 = smul.addr %s2047, 8
        %s2049 = scalar_lea.vmem [#allocation3], %s2048
        // Predicated region
        $region57: #{tpu_custom_call.1} parent=47 // pred_check
          %p2050 = pneg %p216
        $region58: #{tpu_custom_call.1} parent=47 // pred_check_branch
          %2052 = sbr.rel (%p2050) target = $region60
        $region59: #{tpu_custom_call.1} parent=47 // pred_region
          %2054 = vsyncadd %s2046, 0
          %s2055 = smul.addr %s25, 8
          %s2056 = scalar_lea.hbm %s7, %s2055
          %s2058 = sshll.u32 %s2049, 4
          %s2059 = int_to_ptr.vmem [resolvable:$true] %s2058
          %s2060 = sshll.u32 %s2056, 4
          %s2061 = int_to_ptr.hbm [resolvable:$true] %s2060
          %2063 = dma.vmem_to_hbm [thread:$0]  %s2059, 128, %s2061, %s2046
        $region60: #{tpu_custom_call.1} parent=47 // pred_fallthru
          _
      $region48: #{tpu_custom_call.1} parent=5 // pred_fallthru
        _
      %p2064 = scmp.le.s32.totalorder 2, %s16
      // Predicated region
      $region61: #{tpu_custom_call.1} parent=5 // pred_check
        %p2065 = pneg %p2064
      $region62: #{tpu_custom_call.1} parent=5 // pred_check_branch
        %2067 = sbr.rel (%p2065) target = $region64
      $region63: #{tpu_custom_call.1} parent=5 // pred_region
        %s2068 = ssub.s32 %s16, 2
        // Predicated region
        $region65: #{tpu_custom_call.1} parent=63 // pred_check
          %p2069 = pneg %p222
        $region66: #{tpu_custom_call.1} parent=63 // pred_check_branch
          %2071 = sbr.rel (%p2069) target = $region68
        $region67: #{tpu_custom_call.1} parent=63 // pred_region
          %s2072 = sand.u32 %s207, 1
          %s2073 = scalar_lea.sflag [#allocation4], %s2072
          %s2074 = sand.u32 %s207, 1
          %s2075 = smul.addr %s2074, 8
          %s2076 = scalar_lea.vmem [#allocation3], %s2075
          %2078 = dma.done %s2073, 128
        $region68: #{tpu_custom_call.1} parent=63 // pred_fallthru
          _
      $region64: #{tpu_custom_call.1} parent=5 // pred_fallthru
        _
    $region6: #{tpu_custom_call.1} parent=1 // loop_footer
      %s20 = sadd.s32 1, %s16
    $region7: #{tpu_custom_call.1} parent=1 // loop_footer_branch
      %15 = sbr.rel target = $region3
    $region8: #{tpu_custom_call.1} parent=1 // loop_exit
      _
    %2079 = vsyncpa [#allocation4], 1
    %s2080 = scalar_lea.sflag [#allocation4], 1
    %2081 = vsyncpa %s2080, 1

</llo_original>
